<compile_context>
chip_gen: v7x
topology: tpu7x:2x2x1
jax: 0.10.0
libtpu: 0.0.40
codegen_flags: <defaults>
</compile_context>

<pallas_src>
import functools

import jax
import jax.numpy as jnp
from jax import lax
from jax.experimental import pallas as pl
from jax.experimental.pallas import tpu as pltpu

LANE = 128


def _make_conv_stats_kernel(TH, W, KH, KW, Cin, Cout_pad):
    """Conv (im2col, one MXU matmul) + per-tile per-channel sum / sumsq."""

    def kernel(x_ref, w_ref, y_ref, stats_ref):
        # x_ref:     (1, TH+KH-1, W+KW-1, Cin) bf16 haloed input tile (NHWC)
        # w_ref:     (KH*KW*Cin, Cout_pad)     bf16 im2col weights
        # y_ref:     (1, TH*W, Cout_pad)       f32  conv output tile (lane-dense)
        # stats_ref: (1, 2, Cout_pad)          f32  [sum, sumsq] over this tile
        x = x_ref[0]  # (THp, Wp, Cin)

        # im2col: build the (rows, KH*KW*Cin) patch slab and do ONE matmul.
        cols = []
        for kh in range(KH):
            for kw in range(KW):
                cols.append(x[kh:kh + TH, kw:kw + W, :].reshape(TH * W, Cin))
        patch = jnp.concatenate(cols, axis=-1)  # (TH*W, KH*KW*Cin) bf16

        acc = jnp.dot(patch, w_ref[...], preferred_element_type=jnp.float32)  # (TH*W, Cout_pad)

        # Lane-dense store, no reshape.
        y_ref[0] = acc

        # Partial BN statistics for this tile (reduced across tiles in the wrapper).
        s = jnp.sum(acc, axis=0, keepdims=True)          # (1, Cout_pad)
        q = jnp.sum(acc * acc, axis=0, keepdims=True)    # (1, Cout_pad)
        stats_ref[0] = jnp.concatenate([s, q], axis=0)   # (2, Cout_pad)

    return kernel


def _bn_silu_kernel(y_ref, scale_ref, shift_ref, o_ref):
    # y_ref:     (1, TH*W, Cout_pad) f32 conv output tile
    # scale_ref: (1, Cout_pad)       f32 gamma * rsqrt(var + eps)
    # shift_ref: (1, Cout_pad)       f32 beta - mean * scale
    # o_ref:     (1, TH*W, Cout_pad) f32
    z = y_ref[0] * scale_ref[...] + shift_ref[...]
    o_ref[0] = (z * jax.nn.sigmoid(z)).astype(o_ref.dtype)  # SiLU via EUP sigmoid


def _pick_tile_rows(H, W, Cin, Cout_pad, KH, KW, budget_bytes=2 << 20, max_rows=256):
    """Largest divisor of H whose double-buffered tiles fit a conservative VMEM budget."""
    best = 1
    for th in range(1, min(H, max_rows) + 1):
        if H % th:
            continue
        in_b = 2 * (th + KH - 1) * (W + KW - 1) * Cin * 2       # bf16 haloed input, 2 bufs
        out_b = 2 * th * W * Cout_pad * 4                       # f32 conv tile, 2 bufs
        if in_b + out_b <= budget_bytes:
            best = th
    return best


@functools.partial(jax.jit, static_argnames=("eps", "tile_rows"))
def conv2d_norm_act(x_nchw, w_oihw, gamma, beta, *, eps=1e-5, tile_rows=None):
    """Conv2d(bias=False, stride=1, 'same' pad) -> BatchNorm2d (batch stats) -> SiLU."""
    N, Cin, H, W = x_nchw.shape
    Cout, Cin_w, KH, KW = w_oihw.shape
    assert Cin == Cin_w
    assert KH % 2 == 1 and KW % 2 == 1, "only odd kernel sizes ('same' pad) supported"
    ph, pw = KH // 2, KW // 2

    Cout_pad = ((Cout + LANE - 1) // LANE) * LANE

    TH = tile_rows if tile_rows is not None else _pick_tile_rows(H, W, Cin, Cout_pad, KH, KW)
    assert H % TH == 0, "tile_rows must divide H"
    T = H // TH
    NT = N * T
    THp, Wp = TH + KH - 1, W + KW - 1

    # ---- glue: layout + bf16 feed + haloed row tiles (plain JAX) -------------------
    x = jnp.transpose(x_nchw, (0, 2, 3, 1)).astype(jnp.bfloat16)           # NHWC, bf16
    x = jnp.pad(x, ((0, 0), (ph, ph), (pw, pw), (0, 0)))                   # 'same' zero pad
    x_tiles = jnp.stack([x[:, t * TH: t * TH + THp] for t in range(T)], axis=1)
    x_tiles = x_tiles.reshape(NT, THp, Wp, Cin)                            # (NT, THp, Wp, Cin)

    # weights -> (KH*KW*Cin, Cout_pad), row order (kh, kw, cin) to match the patch slab
    w = jnp.transpose(w_oihw, (2, 3, 1, 0)).reshape(KH * KW * Cin, Cout)
    w = jnp.pad(w, ((0, 0), (0, Cout_pad - Cout))).astype(jnp.bfloat16)

    gamma_pad = jnp.pad(gamma.astype(jnp.float32), (0, Cout_pad - Cout))
    beta_pad = jnp.pad(beta.astype(jnp.float32), (0, Cout_pad - Cout))

    cparams = pltpu.CompilerParams(
        dimension_semantics=("parallel",),          # shardable across TCs (v7x megacore)
        vmem_limit_bytes=32 * 1024 * 1024,          # safe on v5e/v6e/v7x scoped VMEM
    )

    # ---- pass 1: conv (im2col) + per-tile BN partial statistics --------------------
    conv_kernel = _make_conv_stats_kernel(TH, W, KH, KW, Cin, Cout_pad)
    y, stats = pl.pallas_call(
        conv_kernel,
        grid=(NT,),
        in_specs=[
            pl.BlockSpec((1, THp, Wp, Cin), lambda i: (i, 0, 0, 0)),
            pl.BlockSpec((KH * KW * Cin, Cout_pad), lambda i: (0, 0)),
        ],
        out_specs=[
            pl.BlockSpec((1, TH * W, Cout_pad), lambda i: (i, 0, 0)),
            pl.BlockSpec((1, 2, Cout_pad), lambda i: (i, 0, 0)),
        ],
        out_shape=[
            jax.ShapeDtypeStruct((NT, TH * W, Cout_pad), jnp.float32),
            jax.ShapeDtypeStruct((NT, 2, Cout_pad), jnp.float32),
        ],
        compiler_params=cparams,
    )(x_tiles, w)

    # ---- BN batch statistics from the per-tile partials (O(Cout) per-channel math) --
    count = float(N * H * W)
    total = jnp.sum(stats, axis=0)                                   # (2, Cout_pad)
    mean = total[0] / count
    var = jnp.maximum(total[1] / count - mean * mean, 0.0)           # biased var, clamped
    scale = (gamma_pad * lax.rsqrt(var + eps)).reshape(1, Cout_pad)
    shift = (beta_pad - mean * gamma_pad * lax.rsqrt(var + eps)).reshape(1, Cout_pad)

    # ---- pass 2: normalize (affine) + SiLU ------------------------------------------
    out = pl.pallas_call(
        _bn_silu_kernel,
        grid=(NT,),
        in_specs=[
            pl.BlockSpec((1, TH * W, Cout_pad), lambda i: (i, 0, 0)),
            pl.BlockSpec((1, Cout_pad), lambda i: (0, 0)),
            pl.BlockSpec((1, Cout_pad), lambda i: (0, 0)),
        ],
        out_specs=pl.BlockSpec((1, TH * W, Cout_pad), lambda i: (i, 0, 0)),
        out_shape=jax.ShapeDtypeStruct((NT, TH * W, Cout_pad), jnp.float32),
        compiler_params=cparams,
    )(y, scale, shift)

    # ---- glue: back to NCHW, drop channel padding -----------------------------------
    out = out.reshape(N, T, TH, W, Cout_pad).reshape(N, H, W, Cout_pad)[..., :Cout]
    return jnp.transpose(out, (0, 3, 1, 2))


def _reference(x_nchw, w_oihw, gamma, beta, eps=1e-5):
    y = lax.conv_general_dilated(
        x_nchw.astype(jnp.float32), w_oihw.astype(jnp.float32),
        window_strides=(1, 1), padding="SAME",
        dimension_numbers=("NCHW", "OIHW", "NCHW"))
    mean = jnp.mean(y, axis=(0, 2, 3), keepdims=True)
    var = jnp.mean((y - mean) ** 2, axis=(0, 2, 3), keepdims=True)
    yh = (y - mean) * lax.rsqrt(var + eps)
    yh = yh * gamma.reshape(1, -1, 1, 1) + beta.reshape(1, -1, 1, 1)
    return yh * jax.nn.sigmoid(yh)


if __name__ == "__main__":
    key = jax.random.PRNGKey(0)
    k_x, k_w, k_g, k_b = jax.random.split(key, 4)

    N, Cin, H, W = 2, 4, 16, 16
    Cout, KH, KW = 8, 3, 3

    x = jax.random.normal(k_x, (N, Cin, H, W), dtype=jnp.float32)
    w = jax.random.normal(k_w, (Cout, Cin, KH, KW), dtype=jnp.float32) * 0.1
    gamma = 1.0 + 0.1 * jax.random.normal(k_g, (Cout,), dtype=jnp.float32)
    beta = 0.1 * jax.random.normal(k_b, (Cout,), dtype=jnp.float32)

    # tile_rows=8 exercises the multi-tile grid (4 grid steps) and the cross-tile BN stats.
    out = conv2d_norm_act(x, w, gamma, beta, tile_rows=8)
    out = jax.block_until_ready(out)

    ref = jax.block_until_ready(_reference(x, w, gamma, beta))
    assert out.shape == (N, Cout, H, W)
    # bf16 MXU feed vs f32 reference -> bf16-appropriate tolerance.
    err = float(jnp.max(jnp.abs(out - ref)))
    assert jnp.allclose(out, ref, atol=2e-2, rtol=2e-2), f"max abs err {err}"

    print("KERNEL_OK")
</pallas_src>

<mosaic_0001>
module attributes {stable_mosaic.version = 11 : i64} {
  func.func @kernel(%arg0: i32, %arg1: memref<1x10x18x4xbf16, #tpu.memory_space<vmem>>, %arg2: memref<36x128xbf16, #tpu.memory_space<vmem>>, %arg3: memref<1x128x128xf32, #tpu.memory_space<vmem>>, %arg4: memref<1x2x128xf32, #tpu.memory_space<vmem>>) attributes {dimension_semantics = [#tpu.dimension_semantics<parallel>], iteration_bounds = array<i64: 4>, scalar_prefetch = 0 : i64, scratch_operands = 0 : i64, tpu.core_type = #tpu.core_type<tc>, window_params = [{transform_indices = @transform_0, window_bounds = array<i64: 1, 10, 18, 4>}, {pipeline_mode = #tpu.pipeline_mode<synchronous>, transform_indices = @transform_1, window_bounds = array<i64: 36, 128>}, {transform_indices = @transform_2, window_bounds = array<i64: 1, 128, 128>}, {transform_indices = @transform_3, window_bounds = array<i64: 1, 2, 128>}]} {
    %c0 = arith.constant 0 : index
    %c0_0 = arith.constant 0 : index
    %c0_1 = arith.constant 0 : index
    %c0_2 = arith.constant 0 : index
    %0 = vector.load %arg1[%c0, %c0_0, %c0_1, %c0_2] : memref<1x10x18x4xbf16, #tpu.memory_space<vmem>>, vector<1x10x18x4xbf16>
    %1 = vector.shape_cast %0 : vector<1x10x18x4xbf16> to vector<10x18x4xbf16>
    %2 = vector.extract_strided_slice %1 {offsets = [0, 0, 0], sizes = [8, 16, 4], strides = [1, 1, 1]} : vector<10x18x4xbf16> to vector<8x16x4xbf16>
    %3 = vector.shape_cast %2 : vector<8x16x4xbf16> to vector<128x4xbf16>
    %4 = vector.extract_strided_slice %1 {offsets = [0, 1, 0], sizes = [8, 16, 4], strides = [1, 1, 1]} : vector<10x18x4xbf16> to vector<8x16x4xbf16>
    %5 = vector.shape_cast %4 : vector<8x16x4xbf16> to vector<128x4xbf16>
    %6 = vector.extract_strided_slice %1 {offsets = [0, 2, 0], sizes = [8, 16, 4], strides = [1, 1, 1]} : vector<10x18x4xbf16> to vector<8x16x4xbf16>
    %7 = vector.shape_cast %6 : vector<8x16x4xbf16> to vector<128x4xbf16>
    %8 = vector.extract_strided_slice %1 {offsets = [1, 0, 0], sizes = [8, 16, 4], strides = [1, 1, 1]} : vector<10x18x4xbf16> to vector<8x16x4xbf16>
    %9 = vector.shape_cast %8 : vector<8x16x4xbf16> to vector<128x4xbf16>
    %10 = vector.extract_strided_slice %1 {offsets = [1, 1, 0], sizes = [8, 16, 4], strides = [1, 1, 1]} : vector<10x18x4xbf16> to vector<8x16x4xbf16>
    %11 = vector.shape_cast %10 : vector<8x16x4xbf16> to vector<128x4xbf16>
    %12 = vector.extract_strided_slice %1 {offsets = [1, 2, 0], sizes = [8, 16, 4], strides = [1, 1, 1]} : vector<10x18x4xbf16> to vector<8x16x4xbf16>
    %13 = vector.shape_cast %12 : vector<8x16x4xbf16> to vector<128x4xbf16>
    %14 = vector.extract_strided_slice %1 {offsets = [2, 0, 0], sizes = [8, 16, 4], strides = [1, 1, 1]} : vector<10x18x4xbf16> to vector<8x16x4xbf16>
    %15 = vector.shape_cast %14 : vector<8x16x4xbf16> to vector<128x4xbf16>
    %16 = vector.extract_strided_slice %1 {offsets = [2, 1, 0], sizes = [8, 16, 4], strides = [1, 1, 1]} : vector<10x18x4xbf16> to vector<8x16x4xbf16>
    %17 = vector.shape_cast %16 : vector<8x16x4xbf16> to vector<128x4xbf16>
    %18 = vector.extract_strided_slice %1 {offsets = [2, 2, 0], sizes = [8, 16, 4], strides = [1, 1, 1]} : vector<10x18x4xbf16> to vector<8x16x4xbf16>
    %19 = vector.shape_cast %18 : vector<8x16x4xbf16> to vector<128x4xbf16>
    %20 = tpu.concatenate %3, %5, %7, %9, %11, %13, %15, %17, %19 in 1 : vector<128x4xbf16>, vector<128x4xbf16>, vector<128x4xbf16>, vector<128x4xbf16>, vector<128x4xbf16>, vector<128x4xbf16>, vector<128x4xbf16>, vector<128x4xbf16>, vector<128x4xbf16> -> vector<128x36xbf16>
    %c0_3 = arith.constant 0 : index
    %c0_4 = arith.constant 0 : index
    %21 = vector.load %arg2[%c0_3, %c0_4] : memref<36x128xbf16, #tpu.memory_space<vmem>>, vector<36x128xbf16>
    %cst = arith.constant dense<0.000000e+00> : vector<128x128xf32>
    %22 = tpu.matmul %20, %21, %cst {dimension_numbers = #tpu.dot_dimension_numbers<[1], [0], [0], [1], [0, 0, 1, 1], [], []>} : vector<128x36xbf16>, vector<36x128xbf16>, vector<128x128xf32> -> vector<128x128xf32>
    %c0_5 = arith.constant 0 : index
    %c0_6 = arith.constant 0 : index
    %c0_7 = arith.constant 0 : index
    %23 = vector.load %arg3[%c0_5, %c0_6, %c0_7] : memref<1x128x128xf32, #tpu.memory_space<vmem>>, vector<1x128x128xf32>
    %24 = vector.shape_cast %23 : vector<1x128x128xf32> to vector<128x128xf32>
    %25 = vector.shape_cast %22 : vector<128x128xf32> to vector<1x128x128xf32>
    tpu.vector_store %arg3[%c0_5, %c0_6, %c0_7], %25 {strides = array<i32>} : memref<1x128x128xf32, #tpu.memory_space<vmem>>, vector<1x128x128xf32>,
    %cst_8 = arith.constant dense<0.000000e+00> : vector<128xf32>
    %26 = vector.multi_reduction <add>, %22, %cst_8 [0] : vector<128x128xf32> to vector<128xf32>
    %27 = vector.shape_cast %26 : vector<128xf32> to vector<1x128xf32>
    %28 = arith.mulf %22, %22 : vector<128x128xf32>
    %cst_9 = arith.constant dense<0.000000e+00> : vector<128xf32>
    %29 = vector.multi_reduction <add>, %28, %cst_9 [0] : vector<128x128xf32> to vector<128xf32>
    %30 = vector.shape_cast %29 : vector<128xf32> to vector<1x128xf32>
    %31 = tpu.concatenate %27, %30 in 0 : vector<1x128xf32>, vector<1x128xf32> -> vector<2x128xf32>
    %c0_10 = arith.constant 0 : index
    %c0_11 = arith.constant 0 : index
    %c0_12 = arith.constant 0 : index
    %32 = vector.load %arg4[%c0_10, %c0_11, %c0_12] : memref<1x2x128xf32, #tpu.memory_space<vmem>>, vector<1x2x128xf32>
    %33 = vector.shape_cast %32 : vector<1x2x128xf32> to vector<2x128xf32>
    %34 = vector.shape_cast %31 : vector<2x128xf32> to vector<1x2x128xf32>
    tpu.vector_store %arg4[%c0_10, %c0_11, %c0_12], %34 {strides = array<i32>} : memref<1x2x128xf32, #tpu.memory_space<vmem>>, vector<1x2x128xf32>,
    return
  }
  func.func @transform_0(%arg0: i32) -> (i32, i32, i32, i32) {
    %c0_i32 = arith.constant 0 : i32
    %c0_i32_0 = arith.constant 0 : i32
    %c0_i32_1 = arith.constant 0 : i32
    %c0_i32_2 = arith.constant 0 : i32
    return %arg0, %c0_i32, %c0_i32_0, %c0_i32_1 : i32, i32, i32, i32
  }
  func.func @transform_1(%arg0: i32) -> (i32, i32) {
    %c0_i32 = arith.constant 0 : i32
    %c0_i32_0 = arith.constant 0 : i32
    %c0_i32_1 = arith.constant 0 : i32
    return %c0_i32, %c0_i32_0 : i32, i32
  }
  func.func @transform_2(%arg0: i32) -> (i32, i32, i32) {
    %c0_i32 = arith.constant 0 : i32
    %c0_i32_0 = arith.constant 0 : i32
    %c0_i32_1 = arith.constant 0 : i32
    return %arg0, %c0_i32, %c0_i32_0 : i32, i32, i32
  }
  func.func @transform_3(%arg0: i32) -> (i32, i32, i32) {
    %c0_i32 = arith.constant 0 : i32
    %c0_i32_0 = arith.constant 0 : i32
    %c0_i32_1 = arith.constant 0 : i32
    return %arg0, %c0_i32, %c0_i32_0 : i32, i32, i32
  }
}

module attributes {stable_mosaic.version = 11 : i64} {
  func.func @_bn_silu_kernel(%arg0: i32, %arg1: memref<1x128x128xf32, #tpu.memory_space<vmem>>, %arg2: memref<1x128xf32, #tpu.memory_space<vmem>>, %arg3: memref<1x128xf32, #tpu.memory_space<vmem>>, %arg4: memref<1x128x128xf32, #tpu.memory_space<vmem>>) attributes {dimension_semantics = [#tpu.dimension_semantics<parallel>], iteration_bounds = array<i64: 4>, scalar_prefetch = 0 : i64, scratch_operands = 0 : i64, tpu.core_type = #tpu.core_type<tc>, window_params = [{transform_indices = @transform_0, window_bounds = array<i64: 1, 128, 128>}, {pipeline_mode = #tpu.pipeline_mode<synchronous>, transform_indices = @transform_1, window_bounds = array<i64: 1, 128>}, {pipeline_mode = #tpu.pipeline_mode<synchronous>, transform_indices = @transform_2, window_bounds = array<i64: 1, 128>}, {transform_indices = @transform_3, window_bounds = array<i64: 1, 128, 128>}]} {
    %c0 = arith.constant 0 : index
    %c0_0 = arith.constant 0 : index
    %c0_1 = arith.constant 0 : index
    %0 = vector.load %arg1[%c0, %c0_0, %c0_1] : memref<1x128x128xf32, #tpu.memory_space<vmem>>, vector<1x128x128xf32>
    %1 = vector.shape_cast %0 : vector<1x128x128xf32> to vector<128x128xf32>
    %c0_2 = arith.constant 0 : index
    %c0_3 = arith.constant 0 : index
    %2 = vector.load %arg2[%c0_2, %c0_3] : memref<1x128xf32, #tpu.memory_space<vmem>>, vector<1x128xf32>
    %3 = vector.broadcast %2 : vector<1x128xf32> to vector<128x128xf32>
    %4 = arith.mulf %1, %3 : vector<128x128xf32>
    %c0_4 = arith.constant 0 : index
    %c0_5 = arith.constant 0 : index
    %5 = vector.load %arg3[%c0_4, %c0_5] : memref<1x128xf32, #tpu.memory_space<vmem>>, vector<1x128xf32>
    %6 = vector.broadcast %5 : vector<1x128xf32> to vector<128x128xf32>
    %7 = arith.addf %4, %6 : vector<128x128xf32>
    %8 = arith.negf %7 : vector<128x128xf32>
    %9 = math.exp %8 : vector<128x128xf32>
    %cst = arith.constant 1.000000e+00 : f32
    %10 = vector.broadcast %cst : f32 to vector<128x128xf32>
    %11 = arith.addf %10, %9 : vector<128x128xf32>
    %12 = arith.divf %10, %11 : vector<128x128xf32>
    %13 = arith.mulf %7, %12 : vector<128x128xf32>
    %c0_6 = arith.constant 0 : index
    %c0_7 = arith.constant 0 : index
    %c0_8 = arith.constant 0 : index
    %14 = vector.load %arg4[%c0_6, %c0_7, %c0_8] : memref<1x128x128xf32, #tpu.memory_space<vmem>>, vector<1x128x128xf32>
    %15 = vector.shape_cast %14 : vector<1x128x128xf32> to vector<128x128xf32>
    %16 = vector.shape_cast %13 : vector<128x128xf32> to vector<1x128x128xf32>
    tpu.vector_store %arg4[%c0_6, %c0_7, %c0_8], %16 {strides = array<i32>} : memref<1x128x128xf32, #tpu.memory_space<vmem>>, vector<1x128x128xf32>,
    return
  }
  func.func @transform_0(%arg0: i32) -> (i32, i32, i32) {
    %c0_i32 = arith.constant 0 : i32
    %c0_i32_0 = arith.constant 0 : i32
    %c0_i32_1 = arith.constant 0 : i32
    return %arg0, %c0_i32, %c0_i32_0 : i32, i32, i32
  }
  func.func @transform_1(%arg0: i32) -> (i32, i32) {
    %c0_i32 = arith.constant 0 : i32
    %c0_i32_0 = arith.constant 0 : i32
    %c0_i32_1 = arith.constant 0 : i32
    return %c0_i32, %c0_i32_0 : i32, i32
  }
  func.func @transform_2(%arg0: i32) -> (i32, i32) {
    %c0_i32 = arith.constant 0 : i32
    %c0_i32_0 = arith.constant 0 : i32
    %c0_i32_1 = arith.constant 0 : i32
    return %c0_i32, %c0_i32_0 : i32, i32
  }
  func.func @transform_3(%arg0: i32) -> (i32, i32, i32) {
    %c0_i32 = arith.constant 0 : i32
    %c0_i32_0 = arith.constant 0 : i32
    %c0_i32_1 = arith.constant 0 : i32
    return %arg0, %c0_i32, %c0_i32_0 : i32, i32, i32
  }
}

</mosaic_0001>

<llo_original>
// kernel: conv2d_norm_act.3
$region0: #{conv2d_norm_act.3}
  #allocation0 [shape = 'u32[]', space=smem, size = 0x4, offset = 0x4, fixed_abs, tag = 'smem constant byte address 0x4 - core index']
  #allocation1 [shape = 'u32[144,128]{1,0:T(1,128)}', space=vmem, size = 0x12000, scoped, tag = 'internal scratch']
  %s0 = inlined_call_operand.vmem [shape: f32[4,128,128], index: 0, kind: input, shape index: {}]
  %s1 = inlined_call_operand.vmem [shape: f32[1,128], index: 1, kind: input, shape index: {}]
  %s2 = inlined_call_operand.vmem [shape: f32[1,128], index: 2, kind: input, shape index: {}]
  %s3 = inlined_call_operand.vmem [shape: f32[4,128,128], index: 3, kind: output, shape index: {}]
  %s4 = sld [smem:[#allocation0]]
  $region45: #{conv2d_norm_act.3} parent=0
    _
  %s6 = ssub.s32 1, %s4
  %s7 = scalar_select 0, %s6, %s4
  loop: start=0, step=1, limit=6
  $region2: #{conv2d_norm_act.3} parent=0 // loop_pre_header
    _
  $region3: #{conv2d_norm_act.3} parent=0 // loop_header
    %s9 = sphi 0, %s13
    %p10 = scmp.ge.s32.totalorder %s9, 6
    %s19 = sphi 0, %s21
    %s22 = sphi 0, %s19
    %s23 = sphi 0, %s22
    %s39 = sphi 0, %s23
    %s43 = sphi 0, %s43
    %s45 = sphi 0, %s43
    %s46 = sphi 0, %s45
    %s60 = sphi 0, %s46
    %s64 = sphi 0, %s64
    %s66 = sphi 0, %s64
    %s67 = sphi 0, %s66
    %s81 = sphi 0, %s67
    %s87 = sphi 0, %s89
    %s90 = sphi 0, %s87
    %s91 = sphi 0, %s90
    %s107 = sphi 0, %s91
  $region4: #{conv2d_norm_act.3} parent=0 // loop_header_branch
    %12 = sbr.rel (%p10) target = $region8
  $region5: #{conv2d_norm_act.3} parent=0 // loop_body
    %s14 = ssub.s32 %s9, 1
    %s15 = ssub.s32 %s9, 2
    %s16 = sadd.s32 %s9, 1
    %s17 = ssub.s32 %s9, %s16
    %p18 = scmp.eq.s32.totalorder %s17, 0
    %s20 = sadd.s32 %s19, 1
    %s21 = scalar_select %p18, %s19, %s20
    %p24 = pneg %p18
    %p25 = scmp.eq.s32.totalorder %s9, 3
    %p26 = por %p24, %p25
    %p27 = scmp.ne.s32.totalorder %s19, %s22
    %p28 = scmp.eq.s32.totalorder %s9, 0
    %p29 = por %p27, %p28
    %p30 = scmp.ne.s32.totalorder %s19, %s22
    %p31 = scmp.eq.s32.totalorder %s14, 3
    %p32 = por %p30, %p31
    %p33 = scmp.ne.s32.totalorder %s22, %s23
    %p34 = scmp.eq.s32.totalorder %s14, 0
    %p35 = por %p33, %p34
    %p36 = scmp.ne.s32.totalorder %s22, %s23
    %p37 = scmp.eq.s32.totalorder %s15, 3
    %p38 = por %p36, %p37
    %p40 = scmp.ne.s32.totalorder %s23, %s39
    %p41 = scmp.eq.s32.totalorder %s15, 0
    %p42 = por %p40, %p41
    %s44 = sadd.s32 %s43, 1
    %p47 = scmp.eq.s32.totalorder %s9, 3
    %p48 = scmp.ne.s32.totalorder %s43, %s45
    %p49 = scmp.eq.s32.totalorder %s9, 0
    %p50 = por %p48, %p49
    %p51 = scmp.ne.s32.totalorder %s43, %s45
    %p52 = scmp.eq.s32.totalorder %s14, 3
    %p53 = por %p51, %p52
    %p54 = scmp.ne.s32.totalorder %s45, %s46
    %p55 = scmp.eq.s32.totalorder %s14, 0
    %p56 = por %p54, %p55
    %p57 = scmp.ne.s32.totalorder %s45, %s46
    %p58 = scmp.eq.s32.totalorder %s15, 3
    %p59 = por %p57, %p58
    %p61 = scmp.ne.s32.totalorder %s46, %s60
    %p62 = scmp.eq.s32.totalorder %s15, 0
    %p63 = por %p61, %p62
    %s65 = sadd.s32 %s64, 1
    %p68 = scmp.eq.s32.totalorder %s9, 3
    %p69 = scmp.ne.s32.totalorder %s64, %s66
    %p70 = scmp.eq.s32.totalorder %s9, 0
    %p71 = por %p69, %p70
    %p72 = scmp.ne.s32.totalorder %s64, %s66
    %p73 = scmp.eq.s32.totalorder %s14, 3
    %p74 = por %p72, %p73
    %p75 = scmp.ne.s32.totalorder %s66, %s67
    %p76 = scmp.eq.s32.totalorder %s14, 0
    %p77 = por %p75, %p76
    %p78 = scmp.ne.s32.totalorder %s66, %s67
    %p79 = scmp.eq.s32.totalorder %s15, 3
    %p80 = por %p78, %p79
    %p82 = scmp.ne.s32.totalorder %s67, %s81
    %p83 = scmp.eq.s32.totalorder %s15, 0
    %p84 = por %p82, %p83
    %s85 = ssub.s32 %s9, %s16
    %p86 = scmp.eq.s32.totalorder %s85, 0
    %s88 = sadd.s32 %s87, 1
    %s89 = scalar_select %p86, %s87, %s88
    %p92 = pneg %p86
    %p93 = scmp.eq.s32.totalorder %s9, 3
    %p94 = por %p92, %p93
    %p95 = scmp.ne.s32.totalorder %s87, %s90
    %p96 = scmp.eq.s32.totalorder %s9, 0
    %p97 = por %p95, %p96
    %p98 = scmp.ne.s32.totalorder %s87, %s90
    %p99 = scmp.eq.s32.totalorder %s14, 3
    %p100 = por %p98, %p99
    %p101 = scmp.ne.s32.totalorder %s90, %s91
    %p102 = scmp.eq.s32.totalorder %s14, 0
    %p103 = por %p101, %p102
    %p104 = scmp.ne.s32.totalorder %s90, %s91
    %p105 = scmp.eq.s32.totalorder %s15, 3
    %p106 = por %p104, %p105
    %p108 = scmp.ne.s32.totalorder %s91, %s107
    %p109 = scmp.eq.s32.totalorder %s15, 0
    %p110 = por %p108, %p109
    %p111 = scmp.le.s32.totalorder 1, %s9
    %p112 = scmp.lt.s32.totalorder %s9, 5
    %p113 = pnand %p111, %p112
    %p114 = pneg %p113
    // Predicated region
    $region9: #{conv2d_norm_act.3} parent=5 // pred_check
      _
    $region10: #{conv2d_norm_act.3} parent=5 // pred_check_branch
      %116 = sbr.rel (%p113) target = $region12
    $region11: #{conv2d_norm_act.3} parent=5 // pred_region
      %s117 = ssub.s32 %s9, 1
      // Predicated region
      $region13: #{conv2d_norm_act.3} parent=11 // pred_check
        %p118 = pneg %p56
      $region14: #{conv2d_norm_act.3} parent=11 // pred_check_branch
        %120 = sbr.rel (%p118) target = $region16
      $region15: #{conv2d_norm_act.3} parent=11 // pred_region
        _
      $region16: #{conv2d_norm_act.3} parent=11 // pred_fallthru
        _
      // Predicated region
      $region17: #{conv2d_norm_act.3} parent=11 // pred_check
        %p121 = pneg %p77
      $region18: #{conv2d_norm_act.3} parent=11 // pred_check_branch
        %123 = sbr.rel (%p121) target = $region20
      $region19: #{conv2d_norm_act.3} parent=11 // pred_region
        _
      $region20: #{conv2d_norm_act.3} parent=11 // pred_fallthru
        _
    $region12: #{conv2d_norm_act.3} parent=5 // pred_fallthru
      _
    %p124 = scmp.lt.s32.totalorder %s9, 4
    // Predicated region
    $region21: #{conv2d_norm_act.3} parent=5 // pred_check
      %p125 = pneg %p124
    $region22: #{conv2d_norm_act.3} parent=5 // pred_check_branch
      %127 = sbr.rel (%p125) target = $region24
    $region23: #{conv2d_norm_act.3} parent=5 // pred_region
      // Predicated region
      $region25: #{conv2d_norm_act.3} parent=23 // pred_check
        %p128 = pneg %p29
      $region26: #{conv2d_norm_act.3} parent=23 // pred_check_branch
        %130 = sbr.rel (%p128) target = $region28
      $region27: #{conv2d_norm_act.3} parent=23 // pred_region
        %p131 = scmp.lt.s32.totalorder %s9, 3
        %s132 = scalar_select %p131, %s9, 3
        %s133 = smul.addr %s132, 16
        %s134 = smul.addr %s133, 8
        %s135 = scalar_lea.vmem %s0, %s134
      $region28: #{conv2d_norm_act.3} parent=23 // pred_fallthru
        _
    $region24: #{conv2d_norm_act.3} parent=5 // pred_fallthru
      _
    %p136 = scmp.le.s32.totalorder 1, %s9
    %p137 = scmp.lt.s32.totalorder %s9, 5
    %p138 = pnand %p136, %p137
    %p139 = pneg %p138
    // Predicated region
    $region29: #{conv2d_norm_act.3} parent=5 // pred_check
      _
    $region30: #{conv2d_norm_act.3} parent=5 // pred_check_branch
      %141 = sbr.rel (%p138) target = $region32
    $region31: #{conv2d_norm_act.3} parent=5 // pred_region
      %s142 = ssub.s32 %s9, 1
      %p143 = scmp.lt.s32.totalorder %s14, 3
      %s144 = scalar_select %p143, %s14, 3
      %s145 = smul.addr %s144, 16
      %s146 = smul.addr %s145, 8
      %s147 = scalar_lea.vmem %s0, %s146
      %p148 = pneg %p35
      %p149 = pneg %p32
      %p150 = pneg %p56
      %p151 = pneg %p53
      %p152 = pneg %p77
      %p153 = pneg %p74
      %p154 = pneg %p103
      %p155 = pneg %p100
      %p156 = scmp.lt.s32.totalorder %s14, 3
      %s157 = scalar_select %p156, %s14, 3
      %s158 = smul.addr %s157, 16
      %s159 = smul.addr %s158, 8
      %s160 = scalar_lea.vmem %s3, %s159
      %p161 = scmp.lt.s32.totalorder %s14, 3
      %s162 = scalar_select %p161, %s14, 3
      %s163 = smul.addr %s162, 16
      %s164 = smul.addr %s163, 8
      %s165 = scalar_lea.vmem %s0, %s164
      %p166 = scmp.lt.s32.totalorder %s14, 3
      %s167 = scalar_select %p166, %s14, 3
      %s168 = smul.addr %s167, 16
      %s169 = smul.addr %s168, 8
      %s170 = scalar_lea.vmem %s3, %s169
      %v171 = vld [vmem:[%s165] sm:$0xff]
      %v172 = vld [vmem:[%s165 + $0x8] sm:$0xff]
      %v173 = vld [vmem:[%s165 + $0x10] sm:$0xff]
      %v174 = vld [vmem:[%s165 + $0x18] sm:$0xff]
      %v175 = vld [vmem:[%s165 + $0x20] sm:$0xff]
      %v176 = vld [vmem:[%s165 + $0x28] sm:$0xff]
      %v177 = vld [vmem:[%s165 + $0x30] sm:$0xff]
      %v178 = vld [vmem:[%s165 + $0x38] sm:$0xff]
      %v179 = vld [vmem:[%s165 + $0x40] sm:$0xff]
      %v180 = vld [vmem:[%s165 + $0x48] sm:$0xff]
      %v181 = vld [vmem:[%s165 + $0x50] sm:$0xff]
      %v182 = vld [vmem:[%s165 + $0x58] sm:$0xff]
      %v183 = vld [vmem:[%s165 + $0x60] sm:$0xff]
      %v184 = vld [vmem:[%s165 + $0x68] sm:$0xff]
      %v185 = vld [vmem:[%s165 + $0x70] sm:$0xff]
      %v186 = vld [vmem:[%s165 + $0x78] sm:$0xff]
      %v187 = vld [vmem:[%s1] sm:$0x1]
      %v189 = vlaneseq
      %v190 = vshrl.u32 %v189, 7
      %v191 = vsub.s32 0, %v190
      %v192 = vrot.slane %v187, %v191
      %v194 = vmul.f32 %v171, %v192
      %v195 = vmul.f32 %v172, %v192
      %v196 = vmul.f32 %v173, %v192
      %v197 = vmul.f32 %v174, %v192
      %v198 = vmul.f32 %v175, %v192
      %v199 = vmul.f32 %v176, %v192
      %v200 = vmul.f32 %v177, %v192
      %v201 = vmul.f32 %v178, %v192
      %v202 = vmul.f32 %v179, %v192
      %v203 = vmul.f32 %v180, %v192
      %v204 = vmul.f32 %v181, %v192
      %v205 = vmul.f32 %v182, %v192
      %v206 = vmul.f32 %v183, %v192
      %v207 = vmul.f32 %v184, %v192
      %v208 = vmul.f32 %v185, %v192
      %v209 = vmul.f32 %v186, %v192
      %v210 = vld [vmem:[%s2] sm:$0x1]
      %v212 = vlaneseq
      %v213 = vshrl.u32 %v212, 7
      %v214 = vsub.s32 0, %v213
      %v215 = vrot.slane %v210, %v214
      %v217 = vadd.f32 %v194, %v215
      %v218 = vadd.f32 %v195, %v215
      %v219 = vadd.f32 %v196, %v215
      %v220 = vadd.f32 %v197, %v215
      %v221 = vadd.f32 %v198, %v215
      %v222 = vadd.f32 %v199, %v215
      %v223 = vadd.f32 %v200, %v215
      %v224 = vadd.f32 %v201, %v215
      %v225 = vadd.f32 %v202, %v215
      %v226 = vadd.f32 %v203, %v215
      %v227 = vadd.f32 %v204, %v215
      %v228 = vadd.f32 %v205, %v215
      %v229 = vadd.f32 %v206, %v215
      %v230 = vadd.f32 %v207, %v215
      %v231 = vadd.f32 %v208, %v215
      %v232 = vadd.f32 %v209, %v215
      %v233 = vxor.u32 %v217, 2147483648
      %v234 = vxor.u32 %v218, 2147483648
      %v235 = vxor.u32 %v219, 2147483648
      %v236 = vxor.u32 %v220, 2147483648
      %v237 = vxor.u32 %v221, 2147483648
      %v238 = vxor.u32 %v222, 2147483648
      %v239 = vxor.u32 %v223, 2147483648
      %v240 = vxor.u32 %v224, 2147483648
      %v241 = vxor.u32 %v225, 2147483648
      %v242 = vxor.u32 %v226, 2147483648
      %v243 = vxor.u32 %v227, 2147483648
      %v244 = vxor.u32 %v228, 2147483648
      %v245 = vxor.u32 %v229, 2147483648
      %v246 = vxor.u32 %v230, 2147483648
      %v247 = vxor.u32 %v231, 2147483648
      %v248 = vxor.u32 %v232, 2147483648
      %v249 = vmul.f32 %v233, 1.442695
      %v250 = vpow.pop %v249
      %v251 = vmul.f32 %v234, 1.442695
      %v252 = vpow.pop %v251
      %v253 = vmul.f32 %v235, 1.442695
      %v254 = vpow.pop %v253
      %v255 = vmul.f32 %v236, 1.442695
      %v256 = vpow.pop %v255
      %v257 = vmul.f32 %v237, 1.442695
      %v258 = vpow.pop %v257
      %v259 = vmul.f32 %v238, 1.442695
      %v260 = vpow.pop %v259
      %v261 = vmul.f32 %v239, 1.442695
      %v262 = vpow.pop %v261
      %v263 = vmul.f32 %v240, 1.442695
      %v264 = vpow.pop %v263
      %v265 = vmul.f32 %v241, 1.442695
      %v266 = vpow.pop %v265
      %v267 = vmul.f32 %v242, 1.442695
      %v268 = vpow.pop %v267
      %v269 = vmul.f32 %v243, 1.442695
      %v270 = vpow.pop %v269
      %v271 = vmul.f32 %v244, 1.442695
      %v272 = vpow.pop %v271
      %v273 = vmul.f32 %v245, 1.442695
      %v274 = vpow.pop %v273
      %v275 = vmul.f32 %v246, 1.442695
      %v276 = vpow.pop %v275
      %v277 = vmul.f32 %v247, 1.442695
      %v278 = vpow.pop %v277
      %v279 = vmul.f32 %v248, 1.442695
      %v280 = vpow.pop %v279
      %v281 = vadd.f32 %v250, 1.0
      %v282 = vadd.f32 %v252, 1.0
      %v283 = vadd.f32 %v254, 1.0
      %v284 = vadd.f32 %v256, 1.0
      %v285 = vadd.f32 %v258, 1.0
      %v286 = vadd.f32 %v260, 1.0
      %v287 = vadd.f32 %v262, 1.0
      %v288 = vadd.f32 %v264, 1.0
      %v289 = vadd.f32 %v266, 1.0
      %v290 = vadd.f32 %v268, 1.0
      %v291 = vadd.f32 %v270, 1.0
      %v292 = vadd.f32 %v272, 1.0
      %v293 = vadd.f32 %v274, 1.0
      %v294 = vadd.f32 %v276, 1.0
      %v295 = vadd.f32 %v278, 1.0
      %v296 = vadd.f32 %v280, 1.0
      %v297 = vrcp.pop %v281
      %v298 = vmul.f32 1.0, %v297
      %v299 = vrcp.pop %v282
      %v300 = vmul.f32 1.0, %v299
      %v301 = vrcp.pop %v283
      %v302 = vmul.f32 1.0, %v301
      %v303 = vrcp.pop %v284
      %v304 = vmul.f32 1.0, %v303
      %v305 = vrcp.pop %v285
      %v306 = vmul.f32 1.0, %v305
      %v307 = vrcp.pop %v286
      %v308 = vmul.f32 1.0, %v307
      %v309 = vrcp.pop %v287
      %v310 = vmul.f32 1.0, %v309
      %v311 = vrcp.pop %v288
      %v312 = vmul.f32 1.0, %v311
      %v313 = vrcp.pop %v289
      %v314 = vmul.f32 1.0, %v313
      %v315 = vrcp.pop %v290
      %v316 = vmul.f32 1.0, %v315
      %v317 = vrcp.pop %v291
      %v318 = vmul.f32 1.0, %v317
      %v319 = vrcp.pop %v292
      %v320 = vmul.f32 1.0, %v319
      %v321 = vrcp.pop %v293
      %v322 = vmul.f32 1.0, %v321
      %v323 = vrcp.pop %v294
      %v324 = vmul.f32 1.0, %v323
      %v325 = vrcp.pop %v295
      %v326 = vmul.f32 1.0, %v325
      %v327 = vrcp.pop %v296
      %v328 = vmul.f32 1.0, %v327
      %v329 = vmul.f32 %v217, %v298
      %v330 = vmul.f32 %v218, %v300
      %v331 = vmul.f32 %v219, %v302
      %v332 = vmul.f32 %v220, %v304
      %v333 = vmul.f32 %v221, %v306
      %v334 = vmul.f32 %v222, %v308
      %v335 = vmul.f32 %v223, %v310
      %v336 = vmul.f32 %v224, %v312
      %v337 = vmul.f32 %v225, %v314
      %v338 = vmul.f32 %v226, %v316
      %v339 = vmul.f32 %v227, %v318
      %v340 = vmul.f32 %v228, %v320
      %v341 = vmul.f32 %v229, %v322
      %v342 = vmul.f32 %v230, %v324
      %v343 = vmul.f32 %v231, %v326
      %v344 = vmul.f32 %v232, %v328
      %345 = vst [vmem:[%s170] sm:$0xff] %v329
      %346 = vst [vmem:[%s170 + $0x8] sm:$0xff] %v330
      %347 = vst [vmem:[%s170 + $0x10] sm:$0xff] %v331
      %348 = vst [vmem:[%s170 + $0x18] sm:$0xff] %v332
      %349 = vst [vmem:[%s170 + $0x20] sm:$0xff] %v333
      %350 = vst [vmem:[%s170 + $0x28] sm:$0xff] %v334
      %351 = vst [vmem:[%s170 + $0x30] sm:$0xff] %v335
      %352 = vst [vmem:[%s170 + $0x38] sm:$0xff] %v336
      %353 = vst [vmem:[%s170 + $0x40] sm:$0xff] %v337
      %354 = vst [vmem:[%s170 + $0x48] sm:$0xff] %v338
      %355 = vst [vmem:[%s170 + $0x50] sm:$0xff] %v339
      %356 = vst [vmem:[%s170 + $0x58] sm:$0xff] %v340
      %357 = vst [vmem:[%s170 + $0x60] sm:$0xff] %v341
      %358 = vst [vmem:[%s170 + $0x68] sm:$0xff] %v342
      %359 = vst [vmem:[%s170 + $0x70] sm:$0xff] %v343
      %360 = vst [vmem:[%s170 + $0x78] sm:$0xff] %v344
      %p361 = scmp.lt.s32.totalorder %s14, 3
      %s362 = scalar_select %p361, %s14, 3
      %s363 = smul.addr %s362, 16
      %s364 = smul.addr %s363, 8
      %s365 = scalar_lea.vmem %s3, %s364
      // Predicated region
      $region33: #{conv2d_norm_act.3} parent=31 // pred_check
        %p366 = pneg %p100
      $region34: #{conv2d_norm_act.3} parent=31 // pred_check_branch
        %368 = sbr.rel (%p366) target = $region36
      $region35: #{conv2d_norm_act.3} parent=31 // pred_region
        _
      $region36: #{conv2d_norm_act.3} parent=31 // pred_fallthru
        _
    $region32: #{conv2d_norm_act.3} parent=5 // pred_fallthru
      _
    %p369 = scmp.le.s32.totalorder 2, %s9
    // Predicated region
    $region37: #{conv2d_norm_act.3} parent=5 // pred_check
      %p370 = pneg %p369
    $region38: #{conv2d_norm_act.3} parent=5 // pred_check_branch
      %372 = sbr.rel (%p370) target = $region40
    $region39: #{conv2d_norm_act.3} parent=5 // pred_region
      %s373 = ssub.s32 %s9, 2
      // Predicated region
      $region41: #{conv2d_norm_act.3} parent=39 // pred_check
        %p374 = pneg %p106
      $region42: #{conv2d_norm_act.3} parent=39 // pred_check_branch
        %376 = sbr.rel (%p374) target = $region44
      $region43: #{conv2d_norm_act.3} parent=39 // pred_region
        %p377 = scmp.lt.s32.totalorder %s15, 3
        %s378 = scalar_select %p377, %s15, 3
        %s379 = smul.addr %s378, 16
        %s380 = smul.addr %s379, 8
        %s381 = scalar_lea.vmem %s3, %s380
      $region44: #{conv2d_norm_act.3} parent=39 // pred_fallthru
        _
    $region40: #{conv2d_norm_act.3} parent=5 // pred_fallthru
      _
  $region6: #{conv2d_norm_act.3} parent=0 // loop_footer
    %s13 = sadd.s32 1, %s9
  $region7: #{conv2d_norm_act.3} parent=0 // loop_footer_branch
    %8 = sbr.rel target = $region3
  $region8: #{conv2d_norm_act.3} parent=0 // loop_exit
    _

// kernel: conv2d_norm_act.2
$region0: #{conv2d_norm_act.2}
  #allocation0 [shape = 'u32[]', space=smem, size = 0x4, offset = 0x4, fixed_abs, tag = 'smem constant byte address 0x4 - core index']
  #allocation1 [shape = 'u32[144,128]{1,0:T(1,128)}', space=vmem, size = 0x12000, scoped, tag = 'internal scratch']
  %s0 = inlined_call_operand.vmem [shape: bf16[4,10,18,4], index: 0, kind: input, shape index: {}]
  %s1 = inlined_call_operand.vmem [shape: bf16[36,128], index: 1, kind: input, shape index: {}]
  %s2 = inlined_call_operand.vmem [shape: f32[4,128,128], index: 2, kind: output, shape index: {0}]
  %s3 = inlined_call_operand.vmem [shape: f32[4,2,128], index: 3, kind: output, shape index: {1}]
  %4 = xla_tuple %s2, %s3
  %s5 = sld [smem:[#allocation0]]
  $region49: #{conv2d_norm_act.2} parent=0
    _
  %s7 = ssub.s32 1, %s5
  %s8 = scalar_select 0, %s7, %s5
  loop: start=0, step=1, limit=6
  $region2: #{conv2d_norm_act.2} parent=0 // loop_pre_header
    _
  $region3: #{conv2d_norm_act.2} parent=0 // loop_header
    %s10 = sphi 0, %s14
    %p11 = scmp.ge.s32.totalorder %s10, 6
    %s20 = sphi 0, %s22
    %s23 = sphi 0, %s20
    %s24 = sphi 0, %s23
    %s40 = sphi 0, %s24
    %s44 = sphi 0, %s44
    %s46 = sphi 0, %s44
    %s47 = sphi 0, %s46
    %s61 = sphi 0, %s47
    %s67 = sphi 0, %s69
    %s70 = sphi 0, %s67
    %s71 = sphi 0, %s70
    %s87 = sphi 0, %s71
    %s93 = sphi 0, %s95
    %s96 = sphi 0, %s93
    %s97 = sphi 0, %s96
    %s113 = sphi 0, %s97
  $region4: #{conv2d_norm_act.2} parent=0 // loop_header_branch
    %13 = sbr.rel (%p11) target = $region8
  $region5: #{conv2d_norm_act.2} parent=0 // loop_body
    %s15 = ssub.s32 %s10, 1
    %s16 = ssub.s32 %s10, 2
    %s17 = sadd.s32 %s10, 1
    %s18 = ssub.s32 %s10, %s17
    %p19 = scmp.eq.s32.totalorder %s18, 0
    %s21 = sadd.s32 %s20, 1
    %s22 = scalar_select %p19, %s20, %s21
    %p25 = pneg %p19
    %p26 = scmp.eq.s32.totalorder %s10, 3
    %p27 = por %p25, %p26
    %p28 = scmp.ne.s32.totalorder %s20, %s23
    %p29 = scmp.eq.s32.totalorder %s10, 0
    %p30 = por %p28, %p29
    %p31 = scmp.ne.s32.totalorder %s20, %s23
    %p32 = scmp.eq.s32.totalorder %s15, 3
    %p33 = por %p31, %p32
    %p34 = scmp.ne.s32.totalorder %s23, %s24
    %p35 = scmp.eq.s32.totalorder %s15, 0
    %p36 = por %p34, %p35
    %p37 = scmp.ne.s32.totalorder %s23, %s24
    %p38 = scmp.eq.s32.totalorder %s16, 3
    %p39 = por %p37, %p38
    %p41 = scmp.ne.s32.totalorder %s24, %s40
    %p42 = scmp.eq.s32.totalorder %s16, 0
    %p43 = por %p41, %p42
    %s45 = sadd.s32 %s44, 1
    %p48 = scmp.eq.s32.totalorder %s10, 3
    %p49 = scmp.ne.s32.totalorder %s44, %s46
    %p50 = scmp.eq.s32.totalorder %s10, 0
    %p51 = por %p49, %p50
    %p52 = scmp.ne.s32.totalorder %s44, %s46
    %p53 = scmp.eq.s32.totalorder %s15, 3
    %p54 = por %p52, %p53
    %p55 = scmp.ne.s32.totalorder %s46, %s47
    %p56 = scmp.eq.s32.totalorder %s15, 0
    %p57 = por %p55, %p56
    %p58 = scmp.ne.s32.totalorder %s46, %s47
    %p59 = scmp.eq.s32.totalorder %s16, 3
    %p60 = por %p58, %p59
    %p62 = scmp.ne.s32.totalorder %s47, %s61
    %p63 = scmp.eq.s32.totalorder %s16, 0
    %p64 = por %p62, %p63
    %s65 = ssub.s32 %s10, %s17
    %p66 = scmp.eq.s32.totalorder %s65, 0
    %s68 = sadd.s32 %s67, 1
    %s69 = scalar_select %p66, %s67, %s68
    %p72 = pneg %p66
    %p73 = scmp.eq.s32.totalorder %s10, 3
    %p74 = por %p72, %p73
    %p75 = scmp.ne.s32.totalorder %s67, %s70
    %p76 = scmp.eq.s32.totalorder %s10, 0
    %p77 = por %p75, %p76
    %p78 = scmp.ne.s32.totalorder %s67, %s70
    %p79 = scmp.eq.s32.totalorder %s15, 3
    %p80 = por %p78, %p79
    %p81 = scmp.ne.s32.totalorder %s70, %s71
    %p82 = scmp.eq.s32.totalorder %s15, 0
    %p83 = por %p81, %p82
    %p84 = scmp.ne.s32.totalorder %s70, %s71
    %p85 = scmp.eq.s32.totalorder %s16, 3
    %p86 = por %p84, %p85
    %p88 = scmp.ne.s32.totalorder %s71, %s87
    %p89 = scmp.eq.s32.totalorder %s16, 0
    %p90 = por %p88, %p89
    %s91 = ssub.s32 %s10, %s17
    %p92 = scmp.eq.s32.totalorder %s91, 0
    %s94 = sadd.s32 %s93, 1
    %s95 = scalar_select %p92, %s93, %s94
    %p98 = pneg %p92
    %p99 = scmp.eq.s32.totalorder %s10, 3
    %p100 = por %p98, %p99
    %p101 = scmp.ne.s32.totalorder %s93, %s96
    %p102 = scmp.eq.s32.totalorder %s10, 0
    %p103 = por %p101, %p102
    %p104 = scmp.ne.s32.totalorder %s93, %s96
    %p105 = scmp.eq.s32.totalorder %s15, 3
    %p106 = por %p104, %p105
    %p107 = scmp.ne.s32.totalorder %s96, %s97
    %p108 = scmp.eq.s32.totalorder %s15, 0
    %p109 = por %p107, %p108
    %p110 = scmp.ne.s32.totalorder %s96, %s97
    %p111 = scmp.eq.s32.totalorder %s16, 3
    %p112 = por %p110, %p111
    %p114 = scmp.ne.s32.totalorder %s97, %s113
    %p115 = scmp.eq.s32.totalorder %s16, 0
    %p116 = por %p114, %p115
    %p117 = scmp.le.s32.totalorder 1, %s10
    %p118 = scmp.lt.s32.totalorder %s10, 5
    %p119 = pnand %p117, %p118
    %p120 = pneg %p119
    // Predicated region
    $region9: #{conv2d_norm_act.2} parent=5 // pred_check
      _
    $region10: #{conv2d_norm_act.2} parent=5 // pred_check_branch
      %122 = sbr.rel (%p119) target = $region12
    $region11: #{conv2d_norm_act.2} parent=5 // pred_region
      %s123 = ssub.s32 %s10, 1
      // Predicated region
      $region13: #{conv2d_norm_act.2} parent=11 // pred_check
        %p124 = pneg %p57
      $region14: #{conv2d_norm_act.2} parent=11 // pred_check_branch
        %126 = sbr.rel (%p124) target = $region16
      $region15: #{conv2d_norm_act.2} parent=11 // pred_region
        _
      $region16: #{conv2d_norm_act.2} parent=11 // pred_fallthru
        _
    $region12: #{conv2d_norm_act.2} parent=5 // pred_fallthru
      _
    %p127 = scmp.lt.s32.totalorder %s10, 4
    // Predicated region
    $region17: #{conv2d_norm_act.2} parent=5 // pred_check
      %p128 = pneg %p127
    $region18: #{conv2d_norm_act.2} parent=5 // pred_check_branch
      %130 = sbr.rel (%p128) target = $region20
    $region19: #{conv2d_norm_act.2} parent=5 // pred_region
      // Predicated region
      $region21: #{conv2d_norm_act.2} parent=19 // pred_check
        %p131 = pneg %p30
      $region22: #{conv2d_norm_act.2} parent=19 // pred_check_branch
        %133 = sbr.rel (%p131) target = $region24
      $region23: #{conv2d_norm_act.2} parent=19 // pred_region
        %p134 = scmp.lt.s32.totalorder %s10, 3
        %s135 = scalar_select %p134, %s10, 3
        %s136 = smul.addr %s135, 30
        %s137 = smul.addr %s136, 4
        %s138 = scalar_lea.vmem %s0, %s137
      $region24: #{conv2d_norm_act.2} parent=19 // pred_fallthru
        _
    $region20: #{conv2d_norm_act.2} parent=5 // pred_fallthru
      _
    %p139 = scmp.le.s32.totalorder 1, %s10
    %p140 = scmp.lt.s32.totalorder %s10, 5
    %p141 = pnand %p139, %p140
    %p142 = pneg %p141
    // Predicated region
    $region25: #{conv2d_norm_act.2} parent=5 // pred_check
      _
    $region26: #{conv2d_norm_act.2} parent=5 // pred_check_branch
      %144 = sbr.rel (%p141) target = $region28
    $region27: #{conv2d_norm_act.2} parent=5 // pred_region
      %s145 = ssub.s32 %s10, 1
      %p146 = scmp.lt.s32.totalorder %s15, 3
      %s147 = scalar_select %p146, %s15, 3
      %s148 = smul.addr %s147, 30
      %s149 = smul.addr %s148, 4
      %s150 = scalar_lea.vmem %s0, %s149
      %p151 = pneg %p36
      %p152 = pneg %p33
      %p153 = pneg %p57
      %p154 = pneg %p54
      %p155 = pneg %p83
      %p156 = pneg %p80
      %p157 = scmp.lt.s32.totalorder %s15, 3
      %s158 = scalar_select %p157, %s15, 3
      %s159 = smul.addr %s158, 16
      %s160 = smul.addr %s159, 8
      %s161 = scalar_lea.vmem %s2, %s160
      %p162 = pneg %p109
      %p163 = pneg %p106
      %p164 = scmp.lt.s32.totalorder %s15, 3
      %s165 = scalar_select %p164, %s15, 3
      %s166 = smul.addr %s165, 2
      %s167 = scalar_lea.vmem %s3, %s166
      %p168 = scmp.lt.s32.totalorder %s15, 3
      %s169 = scalar_select %p168, %s15, 3
      %s170 = smul.addr %s169, 30
      %s171 = smul.addr %s170, 4
      %s172 = scalar_lea.vmem %s0, %s171
      %p173 = scmp.lt.s32.totalorder %s15, 3
      %s174 = scalar_select %p173, %s15, 3
      %s175 = smul.addr %s174, 16
      %s176 = smul.addr %s175, 8
      %s177 = scalar_lea.vmem %s2, %s176
      %p178 = scmp.lt.s32.totalorder %s15, 3
      %s179 = scalar_select %p178, %s15, 3
      %s180 = smul.addr %s179, 2
      %s181 = scalar_lea.vmem %s3, %s180
      %v183 = vld [vmem:[%s172] sm:$0xf]
      %v184 = vld [vmem:[%s172 + $0x4] sm:$0xf]
      %v185 = vld [vmem:[%s172 + $0x8] sm:$0x1]
      %v186 = vld [vmem:[%s172 + $0xc] sm:$0xf]
      %v187 = vld [vmem:[%s172 + $0x10] sm:$0xf]
      %v188 = vld [vmem:[%s172 + $0x14] sm:$0x1]
      %v189 = vld [vmem:[%s172 + $0x18] sm:$0xf]
      %v190 = vld [vmem:[%s172 + $0x1c] sm:$0xf]
      %v191 = vld [vmem:[%s172 + $0x20] sm:$0x1]
      %v192 = vld [vmem:[%s172 + $0x24] sm:$0xf]
      %v193 = vld [vmem:[%s172 + $0x28] sm:$0xf]
      %v194 = vld [vmem:[%s172 + $0x2c] sm:$0x1]
      %v195 = vld [vmem:[%s172 + $0x30] sm:$0xf]
      %v196 = vld [vmem:[%s172 + $0x34] sm:$0xf]
      %v197 = vld [vmem:[%s172 + $0x38] sm:$0x1]
      %v198 = vld [vmem:[%s172 + $0x3c] sm:$0xf]
      %v199 = vld [vmem:[%s172 + $0x40] sm:$0xf]
      %v200 = vld [vmem:[%s172 + $0x44] sm:$0x1]
      %v201 = vld [vmem:[%s172 + $0x48] sm:$0xf]
      %v202 = vld [vmem:[%s172 + $0x4c] sm:$0xf]
      %v203 = vld [vmem:[%s172 + $0x50] sm:$0x1]
      %v204 = vld [vmem:[%s172 + $0x54] sm:$0xf]
      %v205 = vld [vmem:[%s172 + $0x58] sm:$0xf]
      %v206 = vld [vmem:[%s172 + $0x5c] sm:$0x1]
      %v207 = vld [vmem:[%s172 + $0x60] sm:$0xf]
      %v208 = vld [vmem:[%s172 + $0x64] sm:$0xf]
      %v209 = vld [vmem:[%s172 + $0x68] sm:$0x1]
      %v210 = vld [vmem:[%s172 + $0x6c] sm:$0xf]
      %v211 = vld [vmem:[%s172 + $0x70] sm:$0xf]
      %v212 = vld [vmem:[%s172 + $0x74] sm:$0x1]
      %vm213 = vsmask.f32 3328
      %vm214 = vsmask.f32 7440
      %vm215 = vmor %vm213, %vm214
      %v217 = vshrl.u32 %v183, 16
      %v219 = vrot.slane %v217, 4
      %v220 = vshll.u32 %v183, 16
      %v222 = vrot.slane %v220, 5
      %v223 = vor.u32 %v219, %v222
      %v224 = vrot.slane %v223, 4
      %v226 = vshll.u32 %v184, 16
      %v228 = vrot.slane %v226, 5
      %v229 = vsel %vm215, %v224, %v228
      %v230 = vshrl.u32 %v184, 16
      %v232 = vrot.slane %v230, 4
      %v233 = vor.u32 %v232, %v228
      %v234 = vrot.slane %v233, 4
      %v236 = vshll.u32 %v185, 16
      %v238 = vrot.slane %v236, 5
      %v239 = vsel %vm215, %v234, %v238
      %v241 = vshrl.u32 %v186, 16
      %v243 = vrot.slane %v241, 4
      %v244 = vshll.u32 %v186, 16
      %v246 = vrot.slane %v244, 5
      %v247 = vor.u32 %v243, %v246
      %v248 = vrot.slane %v247, 4
      %v250 = vshll.u32 %v187, 16
      %v252 = vrot.slane %v250, 5
      %v253 = vsel %vm215, %v248, %v252
      %v254 = vshrl.u32 %v187, 16
      %v256 = vrot.slane %v254, 4
      %v257 = vor.u32 %v256, %v252
      %v258 = vrot.slane %v257, 4
      %v260 = vshll.u32 %v188, 16
      %v262 = vrot.slane %v260, 5
      %v263 = vsel %vm215, %v258, %v262
      %v265 = vshrl.u32 %v189, 16
      %v267 = vrot.slane %v265, 4
      %v268 = vshll.u32 %v189, 16
      %v270 = vrot.slane %v268, 5
      %v271 = vor.u32 %v267, %v270
      %v272 = vrot.slane %v271, 4
      %v274 = vshll.u32 %v190, 16
      %v276 = vrot.slane %v274, 5
      %v277 = vsel %vm215, %v272, %v276
      %v278 = vshrl.u32 %v190, 16
      %v280 = vrot.slane %v278, 4
      %v281 = vor.u32 %v280, %v276
      %v282 = vrot.slane %v281, 4
      %v284 = vshll.u32 %v191, 16
      %v286 = vrot.slane %v284, 5
      %v287 = vsel %vm215, %v282, %v286
      %v289 = vshrl.u32 %v192, 16
      %v291 = vrot.slane %v289, 4
      %v292 = vshll.u32 %v192, 16
      %v294 = vrot.slane %v292, 5
      %v295 = vor.u32 %v291, %v294
      %v296 = vrot.slane %v295, 4
      %v298 = vshll.u32 %v193, 16
      %v300 = vrot.slane %v298, 5
      %v301 = vsel %vm215, %v296, %v300
      %v302 = vshrl.u32 %v193, 16
      %v304 = vrot.slane %v302, 4
      %v305 = vor.u32 %v304, %v300
      %v306 = vrot.slane %v305, 4
      %v308 = vshll.u32 %v194, 16
      %v310 = vrot.slane %v308, 5
      %v311 = vsel %vm215, %v306, %v310
      %v313 = vshrl.u32 %v195, 16
      %v315 = vrot.slane %v313, 4
      %v316 = vshll.u32 %v195, 16
      %v318 = vrot.slane %v316, 5
      %v319 = vor.u32 %v315, %v318
      %v320 = vrot.slane %v319, 4
      %v322 = vshll.u32 %v196, 16
      %v324 = vrot.slane %v322, 5
      %v325 = vsel %vm215, %v320, %v324
      %v326 = vshrl.u32 %v196, 16
      %v328 = vrot.slane %v326, 4
      %v329 = vor.u32 %v328, %v324
      %v330 = vrot.slane %v329, 4
      %v332 = vshll.u32 %v197, 16
      %v334 = vrot.slane %v332, 5
      %v335 = vsel %vm215, %v330, %v334
      %v337 = vshrl.u32 %v198, 16
      %v339 = vrot.slane %v337, 4
      %v340 = vshll.u32 %v198, 16
      %v342 = vrot.slane %v340, 5
      %v343 = vor.u32 %v339, %v342
      %v344 = vrot.slane %v343, 4
      %v346 = vshll.u32 %v199, 16
      %v348 = vrot.slane %v346, 5
      %v349 = vsel %vm215, %v344, %v348
      %v350 = vshrl.u32 %v199, 16
      %v352 = vrot.slane %v350, 4
      %v353 = vor.u32 %v352, %v348
      %v354 = vrot.slane %v353, 4
      %v356 = vshll.u32 %v200, 16
      %v358 = vrot.slane %v356, 5
      %v359 = vsel %vm215, %v354, %v358
      %v361 = vshrl.u32 %v201, 16
      %v363 = vrot.slane %v361, 4
      %v364 = vshll.u32 %v201, 16
      %v366 = vrot.slane %v364, 5
      %v367 = vor.u32 %v363, %v366
      %v368 = vrot.slane %v367, 4
      %v370 = vshll.u32 %v202, 16
      %v372 = vrot.slane %v370, 5
      %v373 = vsel %vm215, %v368, %v372
      %v374 = vshrl.u32 %v202, 16
      %v376 = vrot.slane %v374, 4
      %v377 = vor.u32 %v376, %v372
      %v378 = vrot.slane %v377, 4
      %v380 = vshll.u32 %v203, 16
      %v382 = vrot.slane %v380, 5
      %v383 = vsel %vm215, %v378, %v382
      %v385 = vshrl.u32 %v204, 16
      %v387 = vrot.slane %v385, 4
      %v388 = vshll.u32 %v204, 16
      %v390 = vrot.slane %v388, 5
      %v391 = vor.u32 %v387, %v390
      %v392 = vrot.slane %v391, 4
      %v394 = vshll.u32 %v205, 16
      %v396 = vrot.slane %v394, 5
      %v397 = vsel %vm215, %v392, %v396
      %v398 = vshrl.u32 %v205, 16
      %v400 = vrot.slane %v398, 4
      %v401 = vor.u32 %v400, %v396
      %v402 = vrot.slane %v401, 4
      %v404 = vshll.u32 %v206, 16
      %v406 = vrot.slane %v404, 5
      %v407 = vsel %vm215, %v402, %v406
      %vm432 = vcmask 1042432
      %vm433 = vcmask 1046532
      %vm434 = vmor %vm432, %vm433
      %v435 = vrot.slane %v183, 5
      %v436 = vrot.slane %v435, 4
      %v437 = vrot.slane %v184, 5
      %v438 = vsel %vm434, %v436, %v437
      %v439 = vrot.slane %v437, 4
      %v440 = vrot.slane %v185, 5
      %v441 = vsel %vm434, %v439, %v440
      %v442 = vrot.slane %v186, 5
      %v443 = vrot.slane %v442, 4
      %v444 = vrot.slane %v187, 5
      %v445 = vsel %vm434, %v443, %v444
      %v446 = vrot.slane %v444, 4
      %v447 = vrot.slane %v188, 5
      %v448 = vsel %vm434, %v446, %v447
      %v449 = vrot.slane %v189, 5
      %v450 = vrot.slane %v449, 4
      %v451 = vrot.slane %v190, 5
      %v452 = vsel %vm434, %v450, %v451
      %v453 = vrot.slane %v451, 4
      %v454 = vrot.slane %v191, 5
      %v455 = vsel %vm434, %v453, %v454
      %v456 = vrot.slane %v192, 5
      %v457 = vrot.slane %v456, 4
      %v458 = vrot.slane %v193, 5
      %v459 = vsel %vm434, %v457, %v458
      %v460 = vrot.slane %v458, 4
      %v461 = vrot.slane %v194, 5
      %v462 = vsel %vm434, %v460, %v461
      %v463 = vrot.slane %v195, 5
      %v464 = vrot.slane %v463, 4
      %v465 = vrot.slane %v196, 5
      %v466 = vsel %vm434, %v464, %v465
      %v467 = vrot.slane %v465, 4
      %v468 = vrot.slane %v197, 5
      %v469 = vsel %vm434, %v467, %v468
      %v470 = vrot.slane %v198, 5
      %v471 = vrot.slane %v470, 4
      %v472 = vrot.slane %v199, 5
      %v473 = vsel %vm434, %v471, %v472
      %v474 = vrot.slane %v472, 4
      %v475 = vrot.slane %v200, 5
      %v476 = vsel %vm434, %v474, %v475
      %v477 = vrot.slane %v201, 5
      %v478 = vrot.slane %v477, 4
      %v479 = vrot.slane %v202, 5
      %v480 = vsel %vm434, %v478, %v479
      %v481 = vrot.slane %v479, 4
      %v482 = vrot.slane %v203, 5
      %v483 = vsel %vm434, %v481, %v482
      %v484 = vrot.slane %v204, 5
      %v485 = vrot.slane %v484, 4
      %v486 = vrot.slane %v205, 5
      %v487 = vsel %vm434, %v485, %v486
      %v488 = vrot.slane %v486, 4
      %v489 = vrot.slane %v206, 5
      %v490 = vsel %vm434, %v488, %v489
      %v492 = vshrl.u32 %v207, 16
      %v494 = vrot.slane %v492, 4
      %v495 = vshll.u32 %v207, 16
      %v497 = vrot.slane %v495, 5
      %v498 = vor.u32 %v494, %v497
      %v499 = vrot.slane %v498, 4
      %v501 = vshll.u32 %v208, 16
      %v503 = vrot.slane %v501, 5
      %v504 = vsel %vm215, %v499, %v503
      %v505 = vshrl.u32 %v208, 16
      %v507 = vrot.slane %v505, 4
      %v508 = vor.u32 %v507, %v503
      %v509 = vrot.slane %v508, 4
      %v511 = vshll.u32 %v209, 16
      %v513 = vrot.slane %v511, 5
      %v514 = vsel %vm215, %v509, %v513
      %v518 = vrot.slane %v207, 5
      %v519 = vrot.slane %v518, 4
      %v520 = vrot.slane %v208, 5
      %v521 = vsel %vm434, %v519, %v520
      %v522 = vrot.slane %v520, 4
      %v523 = vrot.slane %v209, 5
      %v524 = vsel %vm434, %v522, %v523
      %v526 = vshrl.u32 %v210, 16
      %v528 = vrot.slane %v526, 4
      %v529 = vshll.u32 %v210, 16
      %v531 = vrot.slane %v529, 5
      %v532 = vor.u32 %v528, %v531
      %v533 = vrot.slane %v532, 4
      %v535 = vshll.u32 %v211, 16
      %v537 = vrot.slane %v535, 5
      %v538 = vsel %vm215, %v533, %v537
      %v539 = vshrl.u32 %v211, 16
      %v541 = vrot.slane %v539, 4
      %v542 = vor.u32 %v541, %v537
      %v543 = vrot.slane %v542, 4
      %v545 = vshll.u32 %v212, 16
      %v547 = vrot.slane %v545, 5
      %v548 = vsel %vm215, %v543, %v547
      %v552 = vrot.slane %v210, 5
      %v553 = vrot.slane %v552, 4
      %v554 = vrot.slane %v211, 5
      %v555 = vsel %vm434, %v553, %v554
      %v556 = vrot.slane %v554, 4
      %v557 = vrot.slane %v212, 5
      %v558 = vsel %vm434, %v556, %v557
      %v559 = vunpack.c.l.b16 %v183
      %v560 = vunpack.c.l.b16 %v184
      %v561 = vunpack.c.l.b16 %v186
      %v562 = vunpack.c.l.b16 %v187
      %v563 = vunpack.c.l.b16 %v189
      %v564 = vunpack.c.l.b16 %v190
      %v565 = vunpack.c.l.b16 %v192
      %v566 = vunpack.c.l.b16 %v193
      %v567 = vunpack.c.l.b16 %v195
      %v568 = vunpack.c.l.b16 %v196
      %v569 = vunpack.c.l.b16 %v198
      %v570 = vunpack.c.l.b16 %v199
      %v571 = vunpack.c.l.b16 %v201
      %v572 = vunpack.c.l.b16 %v202
      %v573 = vunpack.c.l.b16 %v204
      %v574 = vunpack.c.l.b16 %v205
      %v575 = vpack.c.b16 %v560, %v559
      %v576 = vpack.c.b16 %v562, %v561
      %v577 = vpack.c.b16 %v564, %v563
      %v578 = vpack.c.b16 %v566, %v565
      %v579 = vpack.c.b16 %v568, %v567
      %v580 = vpack.c.b16 %v570, %v569
      %v581 = vpack.c.b16 %v572, %v571
      %v582 = vpack.c.b16 %v574, %v573
      %v583 = vunpack.c.l.b16 %v229
      %v584 = vunpack.c.l.b16 %v239
      %v585 = vunpack.c.l.b16 %v253
      %v586 = vunpack.c.l.b16 %v263
      %v587 = vunpack.c.l.b16 %v277
      %v588 = vunpack.c.l.b16 %v287
      %v589 = vunpack.c.l.b16 %v301
      %v590 = vunpack.c.l.b16 %v311
      %v591 = vunpack.c.l.b16 %v325
      %v592 = vunpack.c.l.b16 %v335
      %v593 = vunpack.c.l.b16 %v349
      %v594 = vunpack.c.l.b16 %v359
      %v595 = vunpack.c.l.b16 %v373
      %v596 = vunpack.c.l.b16 %v383
      %v597 = vunpack.c.l.b16 %v397
      %v598 = vunpack.c.l.b16 %v407
      %v599 = vpack.c.b16 %v584, %v583
      %v600 = vpack.c.b16 %v586, %v585
      %v601 = vpack.c.b16 %v588, %v587
      %v602 = vpack.c.b16 %v590, %v589
      %v603 = vpack.c.b16 %v592, %v591
      %v604 = vpack.c.b16 %v594, %v593
      %v605 = vpack.c.b16 %v596, %v595
      %v606 = vpack.c.b16 %v598, %v597
      %607 = vrot.lane.b32.xlu0 %v599, 4
      %v608 = vpop.permute.xlu0 %607
      %609 = vrot.lane.b32.xlu0 %v600, 4
      %v610 = vpop.permute.xlu0 %609
      %611 = vrot.lane.b32.xlu0 %v601, 4
      %v612 = vpop.permute.xlu0 %611
      %613 = vrot.lane.b32.xlu0 %v602, 4
      %v614 = vpop.permute.xlu0 %613
      %615 = vrot.lane.b32.xlu0 %v603, 4
      %v616 = vpop.permute.xlu0 %615
      %617 = vrot.lane.b32.xlu0 %v604, 4
      %v618 = vpop.permute.xlu0 %617
      %619 = vrot.lane.b32.xlu0 %v605, 4
      %v620 = vpop.permute.xlu0 %619
      %621 = vrot.lane.b32.xlu0 %v606, 4
      %v622 = vpop.permute.xlu0 %621
      %v623 = vunpack.c.l.b16 %v438
      %v624 = vunpack.c.l.b16 %v441
      %v625 = vunpack.c.l.b16 %v445
      %v626 = vunpack.c.l.b16 %v448
      %v627 = vunpack.c.l.b16 %v452
      %v628 = vunpack.c.l.b16 %v455
      %v629 = vunpack.c.l.b16 %v459
      %v630 = vunpack.c.l.b16 %v462
      %v631 = vunpack.c.l.b16 %v466
      %v632 = vunpack.c.l.b16 %v469
      %v633 = vunpack.c.l.b16 %v473
      %v634 = vunpack.c.l.b16 %v476
      %v635 = vunpack.c.l.b16 %v480
      %v636 = vunpack.c.l.b16 %v483
      %v637 = vunpack.c.l.b16 %v487
      %v638 = vunpack.c.l.b16 %v490
      %v639 = vpack.c.b16 %v624, %v623
      %v640 = vpack.c.b16 %v626, %v625
      %v641 = vpack.c.b16 %v628, %v627
      %v642 = vpack.c.b16 %v630, %v629
      %v643 = vpack.c.b16 %v632, %v631
      %v644 = vpack.c.b16 %v634, %v633
      %v645 = vpack.c.b16 %v636, %v635
      %v646 = vpack.c.b16 %v638, %v637
      %647 = vrot.lane.b32.xlu0 %v639, 8
      %v648 = vpop.permute.xlu0 %647
      %649 = vrot.lane.b32.xlu0 %v640, 8
      %v650 = vpop.permute.xlu0 %649
      %651 = vrot.lane.b32.xlu0 %v641, 8
      %v652 = vpop.permute.xlu0 %651
      %653 = vrot.lane.b32.xlu0 %v642, 8
      %v654 = vpop.permute.xlu0 %653
      %655 = vrot.lane.b32.xlu0 %v643, 8
      %v656 = vpop.permute.xlu0 %655
      %657 = vrot.lane.b32.xlu0 %v644, 8
      %v658 = vpop.permute.xlu0 %657
      %659 = vrot.lane.b32.xlu0 %v645, 8
      %v660 = vpop.permute.xlu0 %659
      %661 = vrot.lane.b32.xlu0 %v646, 8
      %v662 = vpop.permute.xlu0 %661
      %v663 = vunpack.c.l.b16 %v207
      %v664 = vunpack.c.l.b16 %v208
      %v665 = vpack.c.b16 %v664, %v663
      %666 = vrot.lane.b32.xlu0 %v576, 12
      %v667 = vpop.permute.xlu0 %666
      %668 = vrot.lane.b32.xlu0 %v577, 12
      %v669 = vpop.permute.xlu0 %668
      %670 = vrot.lane.b32.xlu0 %v578, 12
      %v671 = vpop.permute.xlu0 %670
      %672 = vrot.lane.b32.xlu0 %v579, 12
      %v673 = vpop.permute.xlu0 %672
      %674 = vrot.lane.b32.xlu0 %v580, 12
      %v675 = vpop.permute.xlu0 %674
      %676 = vrot.lane.b32.xlu0 %v581, 12
      %v677 = vpop.permute.xlu0 %676
      %678 = vrot.lane.b32.xlu0 %v582, 12
      %v679 = vpop.permute.xlu0 %678
      %680 = vrot.lane.b32.xlu0 %v665, 12
      %v681 = vpop.permute.xlu0 %680
      %v682 = vunpack.c.l.b16 %v504
      %v683 = vunpack.c.l.b16 %v514
      %v684 = vpack.c.b16 %v683, %v682
      %685 = vrot.lane.b32.xlu0 %v600, 16
      %v686 = vpop.permute.xlu0 %685
      %687 = vrot.lane.b32.xlu0 %v601, 16
      %v688 = vpop.permute.xlu0 %687
      %689 = vrot.lane.b32.xlu0 %v602, 16
      %v690 = vpop.permute.xlu0 %689
      %691 = vrot.lane.b32.xlu0 %v603, 16
      %v692 = vpop.permute.xlu0 %691
      %693 = vrot.lane.b32.xlu0 %v604, 16
      %v694 = vpop.permute.xlu0 %693
      %695 = vrot.lane.b32.xlu0 %v605, 16
      %v696 = vpop.permute.xlu0 %695
      %697 = vrot.lane.b32.xlu0 %v606, 16
      %v698 = vpop.permute.xlu0 %697
      %699 = vrot.lane.b32.xlu0 %v684, 16
      %v700 = vpop.permute.xlu0 %699
      %v701 = vunpack.c.l.b16 %v521
      %v702 = vunpack.c.l.b16 %v524
      %v703 = vpack.c.b16 %v702, %v701
      %704 = vrot.lane.b32.xlu0 %v640, 20
      %v705 = vpop.permute.xlu0 %704
      %706 = vrot.lane.b32.xlu0 %v641, 20
      %v707 = vpop.permute.xlu0 %706
      %708 = vrot.lane.b32.xlu0 %v642, 20
      %v709 = vpop.permute.xlu0 %708
      %710 = vrot.lane.b32.xlu0 %v643, 20
      %v711 = vpop.permute.xlu0 %710
      %712 = vrot.lane.b32.xlu0 %v644, 20
      %v713 = vpop.permute.xlu0 %712
      %714 = vrot.lane.b32.xlu0 %v645, 20
      %v715 = vpop.permute.xlu0 %714
      %716 = vrot.lane.b32.xlu0 %v646, 20
      %v717 = vpop.permute.xlu0 %716
      %718 = vrot.lane.b32.xlu0 %v703, 20
      %v719 = vpop.permute.xlu0 %718
      %v720 = vunpack.c.l.b16 %v210
      %v721 = vunpack.c.l.b16 %v211
      %v722 = vpack.c.b16 %v721, %v720
      %723 = vrot.lane.b32.xlu0 %v577, 24
      %v724 = vpop.permute.xlu0 %723
      %725 = vrot.lane.b32.xlu0 %v578, 24
      %v726 = vpop.permute.xlu0 %725
      %727 = vrot.lane.b32.xlu0 %v579, 24
      %v728 = vpop.permute.xlu0 %727
      %729 = vrot.lane.b32.xlu0 %v580, 24
      %v730 = vpop.permute.xlu0 %729
      %731 = vrot.lane.b32.xlu0 %v581, 24
      %v732 = vpop.permute.xlu0 %731
      %733 = vrot.lane.b32.xlu0 %v582, 24
      %v734 = vpop.permute.xlu0 %733
      %735 = vrot.lane.b32.xlu0 %v665, 24
      %v736 = vpop.permute.xlu0 %735
      %737 = vrot.lane.b32.xlu0 %v722, 24
      %v738 = vpop.permute.xlu0 %737
      %v739 = vunpack.c.l.b16 %v538
      %v740 = vunpack.c.l.b16 %v548
      %v741 = vpack.c.b16 %v740, %v739
      %742 = vrot.lane.b32.xlu0 %v601, 28
      %v743 = vpop.permute.xlu0 %742
      %744 = vrot.lane.b32.xlu0 %v602, 28
      %v745 = vpop.permute.xlu0 %744
      %746 = vrot.lane.b32.xlu0 %v603, 28
      %v747 = vpop.permute.xlu0 %746
      %748 = vrot.lane.b32.xlu0 %v604, 28
      %v749 = vpop.permute.xlu0 %748
      %750 = vrot.lane.b32.xlu0 %v605, 28
      %v751 = vpop.permute.xlu0 %750
      %752 = vrot.lane.b32.xlu0 %v606, 28
      %v753 = vpop.permute.xlu0 %752
      %754 = vrot.lane.b32.xlu0 %v684, 28
      %v755 = vpop.permute.xlu0 %754
      %756 = vrot.lane.b32.xlu0 %v741, 28
      %v757 = vpop.permute.xlu0 %756
      %v758 = vunpack.c.l.b16 %v555
      %v759 = vunpack.c.l.b16 %v558
      %v760 = vpack.c.b16 %v759, %v758
      %761 = vrot.lane.b32.xlu0 %v641, 32
      %v762 = vpop.permute.xlu0 %761
      %763 = vrot.lane.b32.xlu0 %v642, 32
      %v764 = vpop.permute.xlu0 %763
      %765 = vrot.lane.b32.xlu0 %v643, 32
      %v766 = vpop.permute.xlu0 %765
      %767 = vrot.lane.b32.xlu0 %v644, 32
      %v768 = vpop.permute.xlu0 %767
      %769 = vrot.lane.b32.xlu0 %v645, 32
      %v770 = vpop.permute.xlu0 %769
      %771 = vrot.lane.b32.xlu0 %v646, 32
      %v772 = vpop.permute.xlu0 %771
      %773 = vrot.lane.b32.xlu0 %v703, 32
      %v774 = vpop.permute.xlu0 %773
      %775 = vrot.lane.b32.xlu0 %v760, 32
      %v776 = vpop.permute.xlu0 %775
      %vm777 = vcmask 31744
      %v780 = vsel %vm777, %v575, %v608
      %v783 = vsel %vm777, %v576, %v610
      %v786 = vsel %vm777, %v577, %v612
      %v789 = vsel %vm777, %v578, %v614
      %v792 = vsel %vm777, %v579, %v616
      %v795 = vsel %vm777, %v580, %v618
      %v798 = vsel %vm777, %v581, %v620
      %v801 = vsel %vm777, %v582, %v622
      %vm802 = vcmask 64512
      %v804 = vsel %vm802, %v780, %v648
      %v806 = vsel %vm802, %v783, %v650
      %v808 = vsel %vm802, %v786, %v652
      %v810 = vsel %vm802, %v789, %v654
      %v812 = vsel %vm802, %v792, %v656
      %v814 = vsel %vm802, %v795, %v658
      %v816 = vsel %vm802, %v798, %v660
      %v818 = vsel %vm802, %v801, %v662
      %vm819 = vcmask 97280
      %v821 = vsel %vm819, %v804, %v667
      %v823 = vsel %vm819, %v806, %v669
      %v825 = vsel %vm819, %v808, %v671
      %v827 = vsel %vm819, %v810, %v673
      %v829 = vsel %vm819, %v812, %v675
      %v831 = vsel %vm819, %v814, %v677
      %v833 = vsel %vm819, %v816, %v679
      %v835 = vsel %vm819, %v818, %v681
      %vm836 = vcmask 130048
      %v838 = vsel %vm836, %v821, %v686
      %v840 = vsel %vm836, %v823, %v688
      %v842 = vsel %vm836, %v825, %v690
      %v844 = vsel %vm836, %v827, %v692
      %v846 = vsel %vm836, %v829, %v694
      %v848 = vsel %vm836, %v831, %v696
      %v850 = vsel %vm836, %v833, %v698
      %v852 = vsel %vm836, %v835, %v700
      %vm853 = vcmask 162816
      %v855 = vsel %vm853, %v838, %v705
      %v857 = vsel %vm853, %v840, %v707
      %v859 = vsel %vm853, %v842, %v709
      %v861 = vsel %vm853, %v844, %v711
      %v863 = vsel %vm853, %v846, %v713
      %v865 = vsel %vm853, %v848, %v715
      %v867 = vsel %vm853, %v850, %v717
      %v869 = vsel %vm853, %v852, %v719
      %vm870 = vcmask 195584
      %v872 = vsel %vm870, %v855, %v724
      %v874 = vsel %vm870, %v857, %v726
      %v876 = vsel %vm870, %v859, %v728
      %v878 = vsel %vm870, %v861, %v730
      %v880 = vsel %vm870, %v863, %v732
      %v882 = vsel %vm870, %v865, %v734
      %v884 = vsel %vm870, %v867, %v736
      %v886 = vsel %vm870, %v869, %v738
      %vm887 = vcmask 228352
      %v889 = vsel %vm887, %v872, %v743
      %v891 = vsel %vm887, %v874, %v745
      %v893 = vsel %vm887, %v876, %v747
      %v895 = vsel %vm887, %v878, %v749
      %v897 = vsel %vm887, %v880, %v751
      %v899 = vsel %vm887, %v882, %v753
      %v901 = vsel %vm887, %v884, %v755
      %v903 = vsel %vm887, %v886, %v757
      %vm904 = vcmask 261120
      %v906 = vsel %vm904, %v889, %v762
      %v908 = vsel %vm904, %v891, %v764
      %v910 = vsel %vm904, %v893, %v766
      %v912 = vsel %vm904, %v895, %v768
      %v914 = vsel %vm904, %v897, %v770
      %v916 = vsel %vm904, %v899, %v772
      %v918 = vsel %vm904, %v901, %v774
      %v920 = vsel %vm904, %v903, %v776
      %v921 = vld [vmem:[%s1] sm:$0xf]
      %v922 = vld [vmem:[%s1 + $0x4] sm:$0xf]
      %v923 = vld [vmem:[%s1 + $0x8] sm:$0xf]
      %v924 = vld [vmem:[%s1 + $0xc] sm:$0xf]
      %v925 = vld [vmem:[%s1 + $0x10] sm:$0x3]
      %v931 = vunpack.c.l.b16 %v921
      %v932 = vunpack.c.l.b16 %v922
      %v933 = vunpack.c.l.b16 %v923
      %v934 = vunpack.c.l.b16 %v924
      %v935 = vunpack.c.l.b16 %v925
      %v936 = vpack.c.b16 %v932, %v931
      %v937 = vpack.c.b16 %v934, %v933
      %v938 = vpack.c.b16 %v935, %v935
      %vm941 = vcmask 293888
      %v942 = vsel %vm941, %v906, 0
      %v944 = vsel %vm941, %v908, 0
      %v946 = vsel %vm941, %v910, 0
      %v948 = vsel %vm941, %v912, 0
      %v950 = vsel %vm941, %v914, 0
      %v952 = vsel %vm941, %v916, 0
      %v954 = vsel %vm941, %v918, 0
      %v956 = vsel %vm941, %v920, 0
      %vm958 = vcmask 1041408
      %v960 = vsel %vm958, %v938, 0
      %962 = vmatprep.subr.bf16.mxu0 0
      %963 = vmatpush1.bf16.msra.mxu0 %v936
      %964 = vmatprep.subr.bf16.mxu0 0
      %965 = vmatpush1.bf16.msra.mxu0 %v937
      %966 = vmatprep.subr.bf16.mxu0 0
      %967 = vmatpush1.bf16.msra.mxu0 %v960
      %968 = vmatprep.subr.bf16.mxu0 0
      %969 = vmatpush1.bf16.msra.mxu0 0
      %970 = vmatprep.subr.bf16.mxu0 0
      %971 = vmatpush1.bf16.msra.mxu0 0
      %972 = vmatprep.subr.bf16.mxu0 0
      %973 = vmatpush1.bf16.msra.mxu0 0
      %974 = vmatprep.subr.bf16.mxu0 0
      %975 = vmatpush1.bf16.msra.mxu0 0
      %976 = vmatprep.subr.bf16.mxu0 0
      %977 = vmatpush1.bf16.msra.mxu0 0
      %978 = vmatprep.subr.bf16.mxu0 0
      %979 = vmatpush1.bf16.msra.mxu0 0
      %980 = vmatprep.subr.bf16.mxu0 0
      %981 = vmatpush1.bf16.msra.mxu0 0
      %982 = vmatprep.subr.bf16.mxu0 0
      %983 = vmatpush1.bf16.msra.mxu0 0
      %984 = vmatprep.subr.bf16.mxu0 0
      %985 = vmatpush1.bf16.msra.mxu0 0
      %986 = vmatprep.subr.bf16.mxu0 0
      %987 = vmatpush1.bf16.msra.mxu0 0
      %988 = vmatprep.subr.bf16.mxu0 0
      %989 = vmatpush1.bf16.msra.mxu0 0
      %990 = vmatprep.subr.bf16.mxu0 0
      %991 = vmatpush1.bf16.msra.mxu0 0
      %992 = vmatprep.subr.bf16.mxu0 0
      %993 = vmatpush1.bf16.msra.mxu0 0
      %994 = vmatprep.mubr.bf16.mxu0 0
      %995 = vmatmul.mubr.bf16.gmra.mrb[0].mxu0 %v942
      %v996 = vpop.f32.mrb[0].mxu0
      %v997 = vadd.f32 0.0, %v996
      %v998 = vpop.f32.mrb[0].mxu0
      %v999 = vpop.f32.mrb[0].mxu0
      %v1000 = vadd.f32 0.0, %v999
      %v1001 = vpop.f32.mrb[0].mxu0
      %1002 = vmatprep.mubr.bf16.mxu0 0
      %1003 = vmatmul.mubr.bf16.gmra.mrb[0].mxu0 %v944
      %v1004 = vpop.f32.mrb[0].mxu0
      %v1005 = vadd.f32 0.0, %v1004
      %v1006 = vpop.f32.mrb[0].mxu0
      %v1007 = vpop.f32.mrb[0].mxu0
      %v1008 = vadd.f32 0.0, %v1007
      %v1009 = vpop.f32.mrb[0].mxu0
      %1010 = vmatprep.mubr.bf16.mxu0 0
      %1011 = vmatmul.mubr.bf16.gmra.mrb[0].mxu0 %v946
      %v1012 = vpop.f32.mrb[0].mxu0
      %v1013 = vadd.f32 0.0, %v1012
      %v1014 = vpop.f32.mrb[0].mxu0
      %v1015 = vpop.f32.mrb[0].mxu0
      %v1016 = vadd.f32 0.0, %v1015
      %v1017 = vpop.f32.mrb[0].mxu0
      %1018 = vmatprep.mubr.bf16.mxu0 0
      %1019 = vmatmul.mubr.bf16.gmra.mrb[0].mxu0 %v948
      %v1020 = vpop.f32.mrb[0].mxu0
      %v1021 = vadd.f32 0.0, %v1020
      %v1022 = vpop.f32.mrb[0].mxu0
      %v1023 = vpop.f32.mrb[0].mxu0
      %v1024 = vadd.f32 0.0, %v1023
      %v1025 = vpop.f32.mrb[0].mxu0
      %1026 = vmatprep.mubr.bf16.mxu0 0
      %1027 = vmatmul.mubr.bf16.gmra.mrb[0].mxu0 %v950
      %v1028 = vpop.f32.mrb[0].mxu0
      %v1029 = vadd.f32 0.0, %v1028
      %v1030 = vpop.f32.mrb[0].mxu0
      %v1031 = vpop.f32.mrb[0].mxu0
      %v1032 = vadd.f32 0.0, %v1031
      %v1033 = vpop.f32.mrb[0].mxu0
      %1034 = vmatprep.mubr.bf16.mxu0 0
      %1035 = vmatmul.mubr.bf16.gmra.mrb[0].mxu0 %v952
      %v1036 = vpop.f32.mrb[0].mxu0
      %v1037 = vadd.f32 0.0, %v1036
      %v1038 = vpop.f32.mrb[0].mxu0
      %v1039 = vpop.f32.mrb[0].mxu0
      %v1040 = vadd.f32 0.0, %v1039
      %v1041 = vpop.f32.mrb[0].mxu0
      %1042 = vmatprep.mubr.bf16.mxu0 0
      %1043 = vmatmul.mubr.bf16.gmra.mrb[0].mxu0 %v954
      %v1044 = vpop.f32.mrb[0].mxu0
      %v1045 = vadd.f32 0.0, %v1044
      %v1046 = vpop.f32.mrb[0].mxu0
      %v1047 = vpop.f32.mrb[0].mxu0
      %v1048 = vadd.f32 0.0, %v1047
      %v1049 = vpop.f32.mrb[0].mxu0
      %1050 = vmatprep.mubr.bf16.mxu0 0
      %1051 = vmatmul.mubr.bf16.gmra.mrb[0].mxu0 %v956
      %v1052 = vpop.f32.mrb[0].mxu0
      %v1053 = vadd.f32 0.0, %v1052
      %v1054 = vpop.f32.mrb[0].mxu0
      %v1055 = vpop.f32.mrb[0].mxu0
      %v1056 = vadd.f32 0.0, %v1055
      %v1057 = vpop.f32.mrb[0].mxu0
      %1058 = vdwg.mxu0
      %1059 = vst [vmem:[%s177] sm:$0xff] %v997
      %1060 = vst [vmem:[%s177 + $0x8] sm:$0xff] %v1000
      %1061 = vst [vmem:[%s177 + $0x10] sm:$0xff] %v1005
      %1062 = vst [vmem:[%s177 + $0x18] sm:$0xff] %v1008
      %1063 = vst [vmem:[%s177 + $0x20] sm:$0xff] %v1013
      %1064 = vst [vmem:[%s177 + $0x28] sm:$0xff] %v1016
      %1065 = vst [vmem:[%s177 + $0x30] sm:$0xff] %v1021
      %1066 = vst [vmem:[%s177 + $0x38] sm:$0xff] %v1024
      %1067 = vst [vmem:[%s177 + $0x40] sm:$0xff] %v1029
      %1068 = vst [vmem:[%s177 + $0x48] sm:$0xff] %v1032
      %1069 = vst [vmem:[%s177 + $0x50] sm:$0xff] %v1037
      %1070 = vst [vmem:[%s177 + $0x58] sm:$0xff] %v1040
      %1071 = vst [vmem:[%s177 + $0x60] sm:$0xff] %v1045
      %1072 = vst [vmem:[%s177 + $0x68] sm:$0xff] %v1048
      %1073 = vst [vmem:[%s177 + $0x70] sm:$0xff] %v1053
      %1074 = vst [vmem:[%s177 + $0x78] sm:$0xff] %v1056
      %v1075 = vadd.f32 %v997, %v1000
      %v1076 = vadd.f32 %v1075, %v1005
      %v1077 = vadd.f32 %v1076, %v1008
      %v1078 = vadd.f32 %v1077, %v1013
      %v1079 = vadd.f32 %v1078, %v1016
      %v1080 = vadd.f32 %v1079, %v1021
      %v1081 = vadd.f32 %v1080, %v1024
      %v1082 = vadd.f32 %v1081, %v1029
      %v1083 = vadd.f32 %v1082, %v1032
      %v1084 = vadd.f32 %v1083, %v1037
      %v1085 = vadd.f32 %v1084, %v1040
      %v1086 = vadd.f32 %v1085, %v1045
      %v1087 = vadd.f32 %v1086, %v1048
      %v1088 = vadd.f32 %v1087, %v1053
      %v1089 = vadd.f32 %v1088, %v1056
      %v1090 = vrot.slane %v1089, 4
      %v1091 = vadd.f32 %v1089, %v1090
      %v1092 = vrot.slane %v1091, 2
      %v1093 = vadd.f32 %v1091, %v1092
      %v1094 = vrot.slane %v1093, 1
      %v1095 = vadd.f32 %v1093, %v1094
      %v1096 = vmul.f32 %v997, %v997
      %v1097 = vmul.f32 %v1000, %v1000
      %v1098 = vmul.f32 %v1005, %v1005
      %v1099 = vmul.f32 %v1008, %v1008
      %v1100 = vmul.f32 %v1013, %v1013
      %v1101 = vmul.f32 %v1016, %v1016
      %v1102 = vmul.f32 %v1021, %v1021
      %v1103 = vmul.f32 %v1024, %v1024
      %v1104 = vmul.f32 %v1029, %v1029
      %v1105 = vmul.f32 %v1032, %v1032
      %v1106 = vmul.f32 %v1037, %v1037
      %v1107 = vmul.f32 %v1040, %v1040
      %v1108 = vmul.f32 %v1045, %v1045
      %v1109 = vmul.f32 %v1048, %v1048
      %v1110 = vmul.f32 %v1053, %v1053
      %v1111 = vmul.f32 %v1056, %v1056
      %v1112 = vadd.f32 %v1096, %v1097
      %v1113 = vadd.f32 %v1112, %v1098
      %v1114 = vadd.f32 %v1113, %v1099
      %v1115 = vadd.f32 %v1114, %v1100
      %v1116 = vadd.f32 %v1115, %v1101
      %v1117 = vadd.f32 %v1116, %v1102
      %v1118 = vadd.f32 %v1117, %v1103
      %v1119 = vadd.f32 %v1118, %v1104
      %v1120 = vadd.f32 %v1119, %v1105
      %v1121 = vadd.f32 %v1120, %v1106
      %v1122 = vadd.f32 %v1121, %v1107
      %v1123 = vadd.f32 %v1122, %v1108
      %v1124 = vadd.f32 %v1123, %v1109
      %v1125 = vadd.f32 %v1124, %v1110
      %v1126 = vadd.f32 %v1125, %v1111
      %v1127 = vrot.slane %v1126, 4
      %v1128 = vadd.f32 %v1126, %v1127
      %v1129 = vrot.slane %v1128, 2
      %v1130 = vadd.f32 %v1128, %v1129
      %v1131 = vrot.slane %v1130, 1
      %v1132 = vadd.f32 %v1130, %v1131
      %vm1133 = vcmask 1040384
      %v1134 = vsel %vm1133, %v1095, %v1132
      %1135 = vst [vmem:[%s181] sm:$0x3] %v1134
      %p1136 = scmp.lt.s32.totalorder %s15, 3
      %s1137 = scalar_select %p1136, %s15, 3
      %s1138 = smul.addr %s1137, 16
      %s1139 = smul.addr %s1138, 8
      %s1140 = scalar_lea.vmem %s2, %s1139
      %p1141 = scmp.lt.s32.totalorder %s15, 3
      %s1142 = scalar_select %p1141, %s15, 3
      %s1143 = smul.addr %s1142, 2
      %s1144 = scalar_lea.vmem %s3, %s1143
      // Predicated region
      $region29: #{conv2d_norm_act.2} parent=27 // pred_check
        %p1145 = pneg %p80
      $region30: #{conv2d_norm_act.2} parent=27 // pred_check_branch
        %1147 = sbr.rel (%p1145) target = $region32
      $region31: #{conv2d_norm_act.2} parent=27 // pred_region
        _
      $region32: #{conv2d_norm_act.2} parent=27 // pred_fallthru
        _
      // Predicated region
      $region33: #{conv2d_norm_act.2} parent=27 // pred_check
        %p1148 = pneg %p106
      $region34: #{conv2d_norm_act.2} parent=27 // pred_check_branch
        %1150 = sbr.rel (%p1148) target = $region36
      $region35: #{conv2d_norm_act.2} parent=27 // pred_region
        _
      $region36: #{conv2d_norm_act.2} parent=27 // pred_fallthru
        _
    $region28: #{conv2d_norm_act.2} parent=5 // pred_fallthru
      _
    %p1151 = scmp.le.s32.totalorder 2, %s10
    // Predicated region
    $region37: #{conv2d_norm_act.2} parent=5 // pred_check
      %p1152 = pneg %p1151
    $region38: #{conv2d_norm_act.2} parent=5 // pred_check_branch
      %1154 = sbr.rel (%p1152) target = $region40
    $region39: #{conv2d_norm_act.2} parent=5 // pred_region
      %s1155 = ssub.s32 %s10, 2
      // Predicated region
      $region41: #{conv2d_norm_act.2} parent=39 // pred_check
        %p1156 = pneg %p86
      $region42: #{conv2d_norm_act.2} parent=39 // pred_check_branch
        %1158 = sbr.rel (%p1156) target = $region44
      $region43: #{conv2d_norm_act.2} parent=39 // pred_region
        %p1159 = scmp.lt.s32.totalorder %s16, 3
        %s1160 = scalar_select %p1159, %s16, 3
        %s1161 = smul.addr %s1160, 16
        %s1162 = smul.addr %s1161, 8
        %s1163 = scalar_lea.vmem %s2, %s1162
      $region44: #{conv2d_norm_act.2} parent=39 // pred_fallthru
        _
      // Predicated region
      $region45: #{conv2d_norm_act.2} parent=39 // pred_check
        %p1164 = pneg %p112
      $region46: #{conv2d_norm_act.2} parent=39 // pred_check_branch
        %1166 = sbr.rel (%p1164) target = $region48
      $region47: #{conv2d_norm_act.2} parent=39 // pred_region
        %p1167 = scmp.lt.s32.totalorder %s16, 3
        %s1168 = scalar_select %p1167, %s16, 3
        %s1169 = smul.addr %s1168, 2
        %s1170 = scalar_lea.vmem %s3, %s1169
      $region48: #{conv2d_norm_act.2} parent=39 // pred_fallthru
        _
    $region40: #{conv2d_norm_act.2} parent=5 // pred_fallthru
      _
  $region6: #{conv2d_norm_act.2} parent=0 // loop_footer
    %s14 = sadd.s32 1, %s10
  $region7: #{conv2d_norm_act.2} parent=0 // loop_footer_branch
    %9 = sbr.rel target = $region3
  $region8: #{conv2d_norm_act.2} parent=0 // loop_exit
    _

</llo_original>
